<compile_context>
chip_gen: v7x
topology: tpu7x:2x2x1
jax: 0.10.0
libtpu: 0.0.40
codegen_flags: <defaults>
</compile_context>

<pallas_src>
import jax
import jax.numpy as jnp
from jax import lax
from jax.experimental import pallas as pl
from jax.experimental.pallas import tpu as pltpu


def down_block_kernel(x_ref, w1_ref, b1_ref, w2_ref, b2_ref, o_ref):
    """One grid step processes NB batch elements.

    x_ref : (NB*Hh, 2, Wh, 2*Cin)  NHWC rows with the 2x2 pool pairs exposed by
                                   a free (contiguous) wrapper reshape
    w*_ref: (9*C, Cout)            im2col weight matrices (matmul dtype)
    b*_ref: (1, Cout)              float32 biases
    o_ref : (NB, Cout, Hh*Wh)      channel-major, lane-dense output block
    """
    NB = o_ref.shape[0]
    Cout = o_ref.shape[1]
    HW = o_ref.shape[2]
    R = x_ref.shape[0]                 # NB * Hh
    Wh = x_ref.shape[2]
    Cin = x_ref.shape[3] // 2
    Hh = R // NB

    # ---- MaxPool2d(kernel=2, stride=2), fully in VMEM ----------------------
    x = x_ref[...]                                     # (NB*Hh, 2, Wh, 2*Cin)
    hmax = jnp.maximum(x[:, 0], x[:, 1])               # max over the H pair
    pooled = jnp.maximum(hmax[..., :Cin], hmax[..., Cin:])  # max over the W pair
    # pooled: (NB*Hh, Wh, Cin) -- NB images stacked along the row axis.

    # ---- 3x3 "same" conv + bias + ReLU as ONE im2col matmul ----------------
    def conv3x3_relu(src, w_ref, b_ref):
        # src: (NB*Hh, Wh, C)
        C = src.shape[-1]
        src = src.astype(w_ref.dtype)                  # bf16 (or f32) MXU input
        zero = jnp.zeros((), src.dtype)
        zrow = jnp.zeros((1, Wh, C), src.dtype)
        col = lax.broadcasted_iota(jnp.int32, src.shape, 1)        # W index
        rowm = lax.broadcasted_iota(jnp.int32, src.shape, 0) % Hh  # H index in image

        # W-shifted copies (dx = -1, 0, +1): sublane roll + iota mask = zero pad.
        shifted = []
        for dx in (-1, 0, 1):
            if dx == 0:
                shifted.append(src)
            else:
                r = pltpu.roll(src, shift=(-dx) % Wh, axis=1)
                valid = (col + dx >= 0) & (col + dx < Wh)
                shifted.append(jnp.where(valid, r, zero))

        # 9 im2col taps, dy-major / dx-minor -- matches the HWIO weight flatten.
        # H shifts are slices/concats on the untiled row axis + image-edge mask
        # (the mask also keeps rows from leaking across batch-blocked images).
        taps = []
        for dy in (-1, 0, 1):
            for k in range(3):
                s = shifted[k]
                if dy == -1:
                    t = jnp.concatenate([zrow, s[:-1]], axis=0)
                    t = jnp.where(rowm == 0, zero, t)          # top edge
                elif dy == 1:
                    t = jnp.concatenate([s[1:], zrow], axis=0)
                    t = jnp.where(rowm == Hh - 1, zero, t)     # bottom edge
                else:
                    t = s
                taps.append(t)

        patch = jnp.concatenate(taps, axis=-1)         # (NB*Hh, Wh, 9*C)
        patch = patch.reshape(NB * HW, 9 * C)          # free relayout (Wh % 8 == 0)

        acc = jnp.dot(patch, w_ref[...],               # single MXU matmul, K=9*C
                      preferred_element_type=jnp.float32)
        acc = acc + b_ref[...]                         # (1, Cout) broadcast
        return jnp.maximum(acc, 0.0)                   # ReLU, (NB*HW, Cout) f32

    h1 = conv3x3_relu(pooled, w1_ref, b1_ref)
    h2 = conv3x3_relu(h1.reshape(R, Wh, Cout), w2_ref, b2_ref)

    # ---- lane-dense, channel-major store: wrapper reshape to NCHW is free ---
    for p in range(NB):
        o_ref[p] = h2[p * HW:(p + 1) * HW, :].T.astype(o_ref.dtype)


def down_block(x_nchw, w1, b1, w2, b2, *, compute_dtype=jnp.bfloat16):
    """DownBlock forward.  x_nchw: (N, Cin, H, W) -> (N, Cout, H//2, W//2).

    compute_dtype is the MXU input dtype (bf16 default; f32 accumulation
    always).  Pass jnp.float32 for exact f32 semantics.
    """
    N, Cin, H, W = x_nchw.shape
    Hh, Wh = H // 2, W // 2                       # MaxPool2d floors odd dims
    Cout = w1.shape[-1]

    # Glue: one NCHW -> NHWC transpose; the pool-pair reshape below is a pure
    # contiguous-metadata reshape (no extra HBM pass).
    x = jnp.transpose(x_nchw, (0, 2, 3, 1))[:, :2 * Hh, :2 * Wh, :]
    x4 = x.reshape(N * Hh, 2, Wh, 2 * Cin).astype(compute_dtype)

    # Weights: HWIO -> (9*C, Cout) im2col matrices, cast once to matmul dtype.
    w1f = w1.reshape(9 * Cin, Cout).astype(compute_dtype)
    w2f = w2.reshape(9 * Cout, Cout).astype(compute_dtype)
    b1f = b1.reshape(1, Cout).astype(jnp.float32)
    b2f = b2.reshape(1, Cout).astype(jnp.float32)

    # Block NB batch elements per grid step to fill the MXU M dimension when
    # the per-image pixel count is small.
    NB = 2 if (N % 2 == 0 and Hh * Wh < 128) else 1

    out = pl.pallas_call(
        down_block_kernel,
        out_shape=jax.ShapeDtypeStruct((N, Cout, Hh * Wh), x_nchw.dtype),
        grid_spec=pltpu.PrefetchScalarGridSpec(
            num_scalar_prefetch=0,
            grid=(N // NB,),
            in_specs=[
                pl.BlockSpec((NB * Hh, 2, Wh, 2 * Cin), lambda i: (i, 0, 0, 0)),
                # Weight/bias index maps are constant across the grid, so they
                # are only DMA'd once (pipeline keeps the same block resident).
                pl.BlockSpec((9 * Cin, Cout), lambda i: (0, 0)),
                pl.BlockSpec((1, Cout), lambda i: (0, 0)),
                pl.BlockSpec((9 * Cout, Cout), lambda i: (0, 0)),
                pl.BlockSpec((1, Cout), lambda i: (0, 0)),
            ],
            out_specs=pl.BlockSpec((NB, Cout, Hh * Wh), lambda i: (i, 0, 0)),
        ),
        compiler_params=pltpu.CompilerParams(
            dimension_semantics=("parallel",),
            vmem_limit_bytes=64 * 1024 * 1024),
    )(x4, w1f, b1f, w2f, b2f)

    # Free reshape: the kernel already emitted channel-major (NCHW) data.
    return out.reshape(N, Cout, Hh, Wh)


def down_block_reference(x_nchw, w1, b1, w2, b2, compute_dtype=jnp.float32):
    """Pure-JAX reference (MaxPool2d(2) + Conv2d(3, pad=1)+ReLU x2).

    compute_dtype mirrors the kernel's MXU input dtype (f32 accumulation).
    """
    pooled = lax.reduce_window(x_nchw, -jnp.inf, lax.max,
                               (1, 1, 2, 2), (1, 1, 2, 2), 'VALID')

    def conv(x, w, b):
        y = lax.conv_general_dilated(
            x.astype(compute_dtype), w.astype(compute_dtype),
            window_strides=(1, 1), padding='SAME',
            dimension_numbers=('NCHW', 'HWIO', 'NCHW'),
            preferred_element_type=jnp.float32)
        return jax.nn.relu(y + b.reshape(1, -1, 1, 1))

    return conv(conv(pooled, w1, b1), w2, b2)


if __name__ == "__main__":
    N, Cin, Cout, H, W = 2, 4, 8, 16, 16
    key = jax.random.PRNGKey(0)
    kx, k1, k2, k3, k4 = jax.random.split(key, 5)

    x = jax.random.normal(kx, (N, Cin, H, W), jnp.float32)
    # Deterministic synthetic parameters (HWIO layout), shapes per nn.Conv2d.
    w1 = jax.random.normal(k1, (3, 3, Cin, Cout), jnp.float32) * 0.2
    b1 = jax.random.normal(k2, (Cout,), jnp.float32) * 0.1
    w2 = jax.random.normal(k3, (3, 3, Cout, Cout), jnp.float32) * 0.2
    b2 = jax.random.normal(k4, (Cout,), jnp.float32) * 0.1

    # 1) Exact-semantics check: f32 matmul path vs f32 reference.
    out_f32 = jax.block_until_ready(
        down_block(x, w1, b1, w2, b2, compute_dtype=jnp.float32))
    ref_f32 = jax.block_until_ready(
        down_block_reference(x, w1, b1, w2, b2, jnp.float32))
    assert out_f32.shape == (N, Cout, H // 2, W // 2), out_f32.shape
    assert jnp.allclose(out_f32, ref_f32, atol=1e-4, rtol=1e-4), \
        float(jnp.max(jnp.abs(out_f32 - ref_f32)))

    # 2) Performance-default path: bf16 MXU inputs (f32 accumulation) vs a
    #    bf16-input reference (only accumulation-order differences remain).
    out_bf16 = jax.block_until_ready(
        down_block(x, w1, b1, w2, b2, compute_dtype=jnp.bfloat16))
    ref_bf16 = jax.block_until_ready(
        down_block_reference(x, w1, b1, w2, b2, jnp.bfloat16))
    assert jnp.allclose(out_bf16, ref_bf16, atol=2e-2, rtol=2e-2), \
        float(jnp.max(jnp.abs(out_bf16 - ref_bf16)))

    print("KERNEL_OK")
</pallas_src>

<mosaic_0001>
module attributes {stable_mosaic.version = 11 : i64} {
  func.func @down_block_kernel(%arg0: i32, %arg1: memref<16x2x8x8xf32, #tpu.memory_space<vmem>>, %arg2: memref<36x8xf32, #tpu.memory_space<vmem>>, %arg3: memref<1x8xf32, #tpu.memory_space<vmem>>, %arg4: memref<72x8xf32, #tpu.memory_space<vmem>>, %arg5: memref<1x8xf32, #tpu.memory_space<vmem>>, %arg6: memref<2x8x64xf32, #tpu.memory_space<vmem>>) attributes {dimension_semantics = [#tpu.dimension_semantics<parallel>], iteration_bounds = array<i64: 1>, scalar_prefetch = 0 : i64, scratch_operands = 0 : i64, tpu.core_type = #tpu.core_type<tc>, window_params = [{transform_indices = @transform_0, window_bounds = array<i64: 16, 2, 8, 8>}, {pipeline_mode = #tpu.pipeline_mode<synchronous>, transform_indices = @transform_1, window_bounds = array<i64: 36, 8>}, {pipeline_mode = #tpu.pipeline_mode<synchronous>, transform_indices = @transform_2, window_bounds = array<i64: 1, 8>}, {pipeline_mode = #tpu.pipeline_mode<synchronous>, transform_indices = @transform_3, window_bounds = array<i64: 72, 8>}, {pipeline_mode = #tpu.pipeline_mode<synchronous>, transform_indices = @transform_4, window_bounds = array<i64: 1, 8>}, {transform_indices = @transform_5, window_bounds = array<i64: 2, 8, 64>}]} {
    %c0 = arith.constant 0 : index
    %c0_0 = arith.constant 0 : index
    %c0_1 = arith.constant 0 : index
    %c0_2 = arith.constant 0 : index
    %0 = vector.load %arg1[%c0, %c0_0, %c0_1, %c0_2] : memref<16x2x8x8xf32, #tpu.memory_space<vmem>>, vector<16x2x8x8xf32>
    %1 = vector.extract_strided_slice %0 {offsets = [0, 0, 0, 0], sizes = [16, 1, 8, 8], strides = [1, 1, 1, 1]} : vector<16x2x8x8xf32> to vector<16x1x8x8xf32>
    %2 = vector.shape_cast %1 : vector<16x1x8x8xf32> to vector<16x8x8xf32>
    %3 = vector.extract_strided_slice %0 {offsets = [0, 1, 0, 0], sizes = [16, 1, 8, 8], strides = [1, 1, 1, 1]} : vector<16x2x8x8xf32> to vector<16x1x8x8xf32>
    %4 = vector.shape_cast %3 : vector<16x1x8x8xf32> to vector<16x8x8xf32>
    %5 = arith.maximumf %2, %4 : vector<16x8x8xf32>
    %6 = vector.extract_strided_slice %5 {offsets = [0, 0, 0], sizes = [16, 8, 4], strides = [1, 1, 1]} : vector<16x8x8xf32> to vector<16x8x4xf32>
    %7 = vector.extract_strided_slice %5 {offsets = [0, 0, 4], sizes = [16, 8, 4], strides = [1, 1, 1]} : vector<16x8x8xf32> to vector<16x8x4xf32>
    %8 = arith.maximumf %6, %7 : vector<16x8x4xf32>
    %cst = arith.constant 0.000000e+00 : f32
    %9 = vector.broadcast %cst : f32 to vector<1x8x4xf32>
    %10 = tpu.iota {dimensions = array<i32: 1>} : vector<16x8x4xi32>
    %11 = tpu.iota {dimensions = array<i32: 0>} : vector<16x8x4xi32>
    %c8_i32 = arith.constant 8 : i32
    %c0_i32 = arith.constant 0 : i32
    %12 = arith.cmpi eq, %c8_i32, %c0_i32 : i32
    %c1_i32 = arith.constant 1 : i32
    %13 = arith.select %12, %c1_i32, %c8_i32 : i32
    %14 = vector.broadcast %13 : i32 to vector<16x8x4xi32>
    %15 = arith.remsi %11, %14 : vector<16x8x4xi32>
    %c0_i32_3 = arith.constant 0 : i32
    %16 = vector.broadcast %c0_i32_3 : i32 to vector<16x8x4xi32>
    %17 = arith.cmpi ne, %15, %16 : vector<16x8x4xi32>
    %c0_i32_4 = arith.constant 0 : i32
    %18 = vector.broadcast %c0_i32_4 : i32 to vector<16x8x4xi32>
    %19 = arith.cmpi slt, %15, %18 : vector<16x8x4xi32>
    %c0_i32_5 = arith.constant 0 : i32
    %20 = arith.cmpi slt, %13, %c0_i32_5 : i32
    %21 = vector.broadcast %20 : i1 to vector<16x8x4xi1>
    %22 = vector.broadcast %21 : vector<16x8x4xi1> to vector<16x8x4xi1>
    %23 = arith.xori %19, %22 : vector<16x8x4xi1>
    %24 = arith.andi %23, %17 : vector<16x8x4xi1>
    %25 = vector.broadcast %13 : i32 to vector<16x8x4xi32>
    %26 = arith.addi %15, %25 : vector<16x8x4xi32>
    %27 = arith.select %24, %26, %15 : vector<16x8x4xi1>, vector<16x8x4xi32>
    %c1_i32_6 = arith.constant 1 : i32
    %28 = tpu.dynamic_rotate %8 by %c1_i32_6 dim 1 : vector<16x8x4xf32>, i32 -> vector<16x8x4xf32>
    %c-1_i32 = arith.constant -1 : i32
    %29 = vector.broadcast %c-1_i32 : i32 to vector<16x8x4xi32>
    %30 = arith.addi %10, %29 : vector<16x8x4xi32>
    %c0_i32_7 = arith.constant 0 : i32
    %31 = vector.broadcast %c0_i32_7 : i32 to vector<16x8x4xi32>
    %32 = arith.cmpi sge, %30, %31 : vector<16x8x4xi32>
    %c-1_i32_8 = arith.constant -1 : i32
    %33 = vector.broadcast %c-1_i32_8 : i32 to vector<16x8x4xi32>
    %34 = arith.addi %10, %33 : vector<16x8x4xi32>
    %c8_i32_9 = arith.constant 8 : i32
    %35 = vector.broadcast %c8_i32_9 : i32 to vector<16x8x4xi32>
    %36 = arith.cmpi slt, %34, %35 : vector<16x8x4xi32>
    %37 = arith.andi %32, %36 : vector<16x8x4xi1>
    %cst_10 = arith.constant 0.000000e+00 : f32
    %38 = vector.broadcast %cst_10 : f32 to vector<16x8x4xf32>
    %39 = arith.select %37, %28, %38 : vector<16x8x4xi1>, vector<16x8x4xf32>
    %c7_i32 = arith.constant 7 : i32
    %40 = tpu.dynamic_rotate %8 by %c7_i32 dim 1 : vector<16x8x4xf32>, i32 -> vector<16x8x4xf32>
    %c1_i32_11 = arith.constant 1 : i32
    %41 = vector.broadcast %c1_i32_11 : i32 to vector<16x8x4xi32>
    %42 = arith.addi %10, %41 : vector<16x8x4xi32>
    %c0_i32_12 = arith.constant 0 : i32
    %43 = vector.broadcast %c0_i32_12 : i32 to vector<16x8x4xi32>
    %44 = arith.cmpi sge, %42, %43 : vector<16x8x4xi32>
    %c1_i32_13 = arith.constant 1 : i32
    %45 = vector.broadcast %c1_i32_13 : i32 to vector<16x8x4xi32>
    %46 = arith.addi %10, %45 : vector<16x8x4xi32>
    %c8_i32_14 = arith.constant 8 : i32
    %47 = vector.broadcast %c8_i32_14 : i32 to vector<16x8x4xi32>
    %48 = arith.cmpi slt, %46, %47 : vector<16x8x4xi32>
    %49 = arith.andi %44, %48 : vector<16x8x4xi1>
    %cst_15 = arith.constant 0.000000e+00 : f32
    %50 = vector.broadcast %cst_15 : f32 to vector<16x8x4xf32>
    %51 = arith.select %49, %40, %50 : vector<16x8x4xi1>, vector<16x8x4xf32>
    %52 = vector.extract_strided_slice %39 {offsets = [0, 0, 0], sizes = [15, 8, 4], strides = [1, 1, 1]} : vector<16x8x4xf32> to vector<15x8x4xf32>
    %53 = tpu.concatenate %9, %52 in 0 : vector<1x8x4xf32>, vector<15x8x4xf32> -> vector<16x8x4xf32>
    %c0_i32_16 = arith.constant 0 : i32
    %54 = vector.broadcast %c0_i32_16 : i32 to vector<16x8x4xi32>
    %55 = arith.cmpi eq, %27, %54 : vector<16x8x4xi32>
    %cst_17 = arith.constant 0.000000e+00 : f32
    %56 = vector.broadcast %cst_17 : f32 to vector<16x8x4xf32>
    %57 = arith.select %55, %56, %53 : vector<16x8x4xi1>, vector<16x8x4xf32>
    %58 = vector.extract_strided_slice %8 {offsets = [0, 0, 0], sizes = [15, 8, 4], strides = [1, 1, 1]} : vector<16x8x4xf32> to vector<15x8x4xf32>
    %59 = tpu.concatenate %9, %58 in 0 : vector<1x8x4xf32>, vector<15x8x4xf32> -> vector<16x8x4xf32>
    %c0_i32_18 = arith.constant 0 : i32
    %60 = vector.broadcast %c0_i32_18 : i32 to vector<16x8x4xi32>
    %61 = arith.cmpi eq, %27, %60 : vector<16x8x4xi32>
    %cst_19 = arith.constant 0.000000e+00 : f32
    %62 = vector.broadcast %cst_19 : f32 to vector<16x8x4xf32>
    %63 = arith.select %61, %62, %59 : vector<16x8x4xi1>, vector<16x8x4xf32>
    %64 = vector.extract_strided_slice %51 {offsets = [0, 0, 0], sizes = [15, 8, 4], strides = [1, 1, 1]} : vector<16x8x4xf32> to vector<15x8x4xf32>
    %65 = tpu.concatenate %9, %64 in 0 : vector<1x8x4xf32>, vector<15x8x4xf32> -> vector<16x8x4xf32>
    %c0_i32_20 = arith.constant 0 : i32
    %66 = vector.broadcast %c0_i32_20 : i32 to vector<16x8x4xi32>
    %67 = arith.cmpi eq, %27, %66 : vector<16x8x4xi32>
    %cst_21 = arith.constant 0.000000e+00 : f32
    %68 = vector.broadcast %cst_21 : f32 to vector<16x8x4xf32>
    %69 = arith.select %67, %68, %65 : vector<16x8x4xi1>, vector<16x8x4xf32>
    %70 = vector.extract_strided_slice %39 {offsets = [1, 0, 0], sizes = [15, 8, 4], strides = [1, 1, 1]} : vector<16x8x4xf32> to vector<15x8x4xf32>
    %71 = tpu.concatenate %70, %9 in 0 : vector<15x8x4xf32>, vector<1x8x4xf32> -> vector<16x8x4xf32>
    %c7_i32_22 = arith.constant 7 : i32
    %72 = vector.broadcast %c7_i32_22 : i32 to vector<16x8x4xi32>
    %73 = arith.cmpi eq, %27, %72 : vector<16x8x4xi32>
    %cst_23 = arith.constant 0.000000e+00 : f32
    %74 = vector.broadcast %cst_23 : f32 to vector<16x8x4xf32>
    %75 = arith.select %73, %74, %71 : vector<16x8x4xi1>, vector<16x8x4xf32>
    %76 = vector.extract_strided_slice %8 {offsets = [1, 0, 0], sizes = [15, 8, 4], strides = [1, 1, 1]} : vector<16x8x4xf32> to vector<15x8x4xf32>
    %77 = tpu.concatenate %76, %9 in 0 : vector<15x8x4xf32>, vector<1x8x4xf32> -> vector<16x8x4xf32>
    %c7_i32_24 = arith.constant 7 : i32
    %78 = vector.broadcast %c7_i32_24 : i32 to vector<16x8x4xi32>
    %79 = arith.cmpi eq, %27, %78 : vector<16x8x4xi32>
    %cst_25 = arith.constant 0.000000e+00 : f32
    %80 = vector.broadcast %cst_25 : f32 to vector<16x8x4xf32>
    %81 = arith.select %79, %80, %77 : vector<16x8x4xi1>, vector<16x8x4xf32>
    %82 = vector.extract_strided_slice %51 {offsets = [1, 0, 0], sizes = [15, 8, 4], strides = [1, 1, 1]} : vector<16x8x4xf32> to vector<15x8x4xf32>
    %83 = tpu.concatenate %82, %9 in 0 : vector<15x8x4xf32>, vector<1x8x4xf32> -> vector<16x8x4xf32>
    %c7_i32_26 = arith.constant 7 : i32
    %84 = vector.broadcast %c7_i32_26 : i32 to vector<16x8x4xi32>
    %85 = arith.cmpi eq, %27, %84 : vector<16x8x4xi32>
    %cst_27 = arith.constant 0.000000e+00 : f32
    %86 = vector.broadcast %cst_27 : f32 to vector<16x8x4xf32>
    %87 = arith.select %85, %86, %83 : vector<16x8x4xi1>, vector<16x8x4xf32>
    %88 = tpu.concatenate %57, %63, %69, %39, %8, %51, %75, %81, %87 in 2 : vector<16x8x4xf32>, vector<16x8x4xf32>, vector<16x8x4xf32>, vector<16x8x4xf32>, vector<16x8x4xf32>, vector<16x8x4xf32>, vector<16x8x4xf32>, vector<16x8x4xf32>, vector<16x8x4xf32> -> vector<16x8x36xf32>
    %89 = vector.shape_cast %88 : vector<16x8x36xf32> to vector<128x36xf32>
    %c0_28 = arith.constant 0 : index
    %c0_29 = arith.constant 0 : index
    %90 = vector.load %arg2[%c0_28, %c0_29] : memref<36x8xf32, #tpu.memory_space<vmem>>, vector<36x8xf32>
    %cst_30 = arith.constant dense<0.000000e+00> : vector<128x8xf32>
    %91 = tpu.matmul %89, %90, %cst_30 {dimension_numbers = #tpu.dot_dimension_numbers<[1], [0], [0], [1], [0, 0, 1, 1], [], []>} : vector<128x36xf32>, vector<36x8xf32>, vector<128x8xf32> -> vector<128x8xf32>
    %c0_31 = arith.constant 0 : index
    %c0_32 = arith.constant 0 : index
    %92 = vector.load %arg3[%c0_31, %c0_32] : memref<1x8xf32, #tpu.memory_space<vmem>>, vector<1x8xf32>
    %93 = vector.broadcast %92 : vector<1x8xf32> to vector<128x8xf32>
    %94 = arith.addf %91, %93 : vector<128x8xf32>
    %cst_33 = arith.constant 0.000000e+00 : f32
    %95 = vector.broadcast %cst_33 : f32 to vector<128x8xf32>
    %96 = arith.maximumf %94, %95 : vector<128x8xf32>
    %97 = vector.shape_cast %96 : vector<128x8xf32> to vector<16x8x8xf32>
    %cst_34 = arith.constant 0.000000e+00 : f32
    %98 = vector.broadcast %cst_34 : f32 to vector<1x8x8xf32>
    %99 = tpu.iota {dimensions = array<i32: 1>} : vector<16x8x8xi32>
    %100 = tpu.iota {dimensions = array<i32: 0>} : vector<16x8x8xi32>
    %c8_i32_35 = arith.constant 8 : i32
    %c0_i32_36 = arith.constant 0 : i32
    %101 = arith.cmpi eq, %c8_i32_35, %c0_i32_36 : i32
    %c1_i32_37 = arith.constant 1 : i32
    %102 = arith.select %101, %c1_i32_37, %c8_i32_35 : i32
    %103 = vector.broadcast %102 : i32 to vector<16x8x8xi32>
    %104 = arith.remsi %100, %103 : vector<16x8x8xi32>
    %c0_i32_38 = arith.constant 0 : i32
    %105 = vector.broadcast %c0_i32_38 : i32 to vector<16x8x8xi32>
    %106 = arith.cmpi ne, %104, %105 : vector<16x8x8xi32>
    %c0_i32_39 = arith.constant 0 : i32
    %107 = vector.broadcast %c0_i32_39 : i32 to vector<16x8x8xi32>
    %108 = arith.cmpi slt, %104, %107 : vector<16x8x8xi32>
    %c0_i32_40 = arith.constant 0 : i32
    %109 = arith.cmpi slt, %102, %c0_i32_40 : i32
    %110 = vector.broadcast %109 : i1 to vector<16x8x8xi1>
    %111 = vector.broadcast %110 : vector<16x8x8xi1> to vector<16x8x8xi1>
    %112 = arith.xori %108, %111 : vector<16x8x8xi1>
    %113 = arith.andi %112, %106 : vector<16x8x8xi1>
    %114 = vector.broadcast %102 : i32 to vector<16x8x8xi32>
    %115 = arith.addi %104, %114 : vector<16x8x8xi32>
    %116 = arith.select %113, %115, %104 : vector<16x8x8xi1>, vector<16x8x8xi32>
    %c1_i32_41 = arith.constant 1 : i32
    %117 = tpu.dynamic_rotate %97 by %c1_i32_41 dim 1 : vector<16x8x8xf32>, i32 -> vector<16x8x8xf32>
    %c-1_i32_42 = arith.constant -1 : i32
    %118 = vector.broadcast %c-1_i32_42 : i32 to vector<16x8x8xi32>
    %119 = arith.addi %99, %118 : vector<16x8x8xi32>
    %c0_i32_43 = arith.constant 0 : i32
    %120 = vector.broadcast %c0_i32_43 : i32 to vector<16x8x8xi32>
    %121 = arith.cmpi sge, %119, %120 : vector<16x8x8xi32>
    %c-1_i32_44 = arith.constant -1 : i32
    %122 = vector.broadcast %c-1_i32_44 : i32 to vector<16x8x8xi32>
    %123 = arith.addi %99, %122 : vector<16x8x8xi32>
    %c8_i32_45 = arith.constant 8 : i32
    %124 = vector.broadcast %c8_i32_45 : i32 to vector<16x8x8xi32>
    %125 = arith.cmpi slt, %123, %124 : vector<16x8x8xi32>
    %126 = arith.andi %121, %125 : vector<16x8x8xi1>
    %cst_46 = arith.constant 0.000000e+00 : f32
    %127 = vector.broadcast %cst_46 : f32 to vector<16x8x8xf32>
    %128 = arith.select %126, %117, %127 : vector<16x8x8xi1>, vector<16x8x8xf32>
    %c7_i32_47 = arith.constant 7 : i32
    %129 = tpu.dynamic_rotate %97 by %c7_i32_47 dim 1 : vector<16x8x8xf32>, i32 -> vector<16x8x8xf32>
    %c1_i32_48 = arith.constant 1 : i32
    %130 = vector.broadcast %c1_i32_48 : i32 to vector<16x8x8xi32>
    %131 = arith.addi %99, %130 : vector<16x8x8xi32>
    %c0_i32_49 = arith.constant 0 : i32
    %132 = vector.broadcast %c0_i32_49 : i32 to vector<16x8x8xi32>
    %133 = arith.cmpi sge, %131, %132 : vector<16x8x8xi32>
    %c1_i32_50 = arith.constant 1 : i32
    %134 = vector.broadcast %c1_i32_50 : i32 to vector<16x8x8xi32>
    %135 = arith.addi %99, %134 : vector<16x8x8xi32>
    %c8_i32_51 = arith.constant 8 : i32
    %136 = vector.broadcast %c8_i32_51 : i32 to vector<16x8x8xi32>
    %137 = arith.cmpi slt, %135, %136 : vector<16x8x8xi32>
    %138 = arith.andi %133, %137 : vector<16x8x8xi1>
    %cst_52 = arith.constant 0.000000e+00 : f32
    %139 = vector.broadcast %cst_52 : f32 to vector<16x8x8xf32>
    %140 = arith.select %138, %129, %139 : vector<16x8x8xi1>, vector<16x8x8xf32>
    %141 = vector.extract_strided_slice %128 {offsets = [0, 0, 0], sizes = [15, 8, 8], strides = [1, 1, 1]} : vector<16x8x8xf32> to vector<15x8x8xf32>
    %142 = tpu.concatenate %98, %141 in 0 : vector<1x8x8xf32>, vector<15x8x8xf32> -> vector<16x8x8xf32>
    %c0_i32_53 = arith.constant 0 : i32
    %143 = vector.broadcast %c0_i32_53 : i32 to vector<16x8x8xi32>
    %144 = arith.cmpi eq, %116, %143 : vector<16x8x8xi32>
    %cst_54 = arith.constant 0.000000e+00 : f32
    %145 = vector.broadcast %cst_54 : f32 to vector<16x8x8xf32>
    %146 = arith.select %144, %145, %142 : vector<16x8x8xi1>, vector<16x8x8xf32>
    %147 = vector.extract_strided_slice %97 {offsets = [0, 0, 0], sizes = [15, 8, 8], strides = [1, 1, 1]} : vector<16x8x8xf32> to vector<15x8x8xf32>
    %148 = tpu.concatenate %98, %147 in 0 : vector<1x8x8xf32>, vector<15x8x8xf32> -> vector<16x8x8xf32>
    %c0_i32_55 = arith.constant 0 : i32
    %149 = vector.broadcast %c0_i32_55 : i32 to vector<16x8x8xi32>
    %150 = arith.cmpi eq, %116, %149 : vector<16x8x8xi32>
    %cst_56 = arith.constant 0.000000e+00 : f32
    %151 = vector.broadcast %cst_56 : f32 to vector<16x8x8xf32>
    %152 = arith.select %150, %151, %148 : vector<16x8x8xi1>, vector<16x8x8xf32>
    %153 = vector.extract_strided_slice %140 {offsets = [0, 0, 0], sizes = [15, 8, 8], strides = [1, 1, 1]} : vector<16x8x8xf32> to vector<15x8x8xf32>
    %154 = tpu.concatenate %98, %153 in 0 : vector<1x8x8xf32>, vector<15x8x8xf32> -> vector<16x8x8xf32>
    %c0_i32_57 = arith.constant 0 : i32
    %155 = vector.broadcast %c0_i32_57 : i32 to vector<16x8x8xi32>
    %156 = arith.cmpi eq, %116, %155 : vector<16x8x8xi32>
    %cst_58 = arith.constant 0.000000e+00 : f32
    %157 = vector.broadcast %cst_58 : f32 to vector<16x8x8xf32>
    %158 = arith.select %156, %157, %154 : vector<16x8x8xi1>, vector<16x8x8xf32>
    %159 = vector.extract_strided_slice %128 {offsets = [1, 0, 0], sizes = [15, 8, 8], strides = [1, 1, 1]} : vector<16x8x8xf32> to vector<15x8x8xf32>
    %160 = tpu.concatenate %159, %98 in 0 : vector<15x8x8xf32>, vector<1x8x8xf32> -> vector<16x8x8xf32>
    %c7_i32_59 = arith.constant 7 : i32
    %161 = vector.broadcast %c7_i32_59 : i32 to vector<16x8x8xi32>
    %162 = arith.cmpi eq, %116, %161 : vector<16x8x8xi32>
    %cst_60 = arith.constant 0.000000e+00 : f32
    %163 = vector.broadcast %cst_60 : f32 to vector<16x8x8xf32>
    %164 = arith.select %162, %163, %160 : vector<16x8x8xi1>, vector<16x8x8xf32>
    %165 = vector.extract_strided_slice %97 {offsets = [1, 0, 0], sizes = [15, 8, 8], strides = [1, 1, 1]} : vector<16x8x8xf32> to vector<15x8x8xf32>
    %166 = tpu.concatenate %165, %98 in 0 : vector<15x8x8xf32>, vector<1x8x8xf32> -> vector<16x8x8xf32>
    %c7_i32_61 = arith.constant 7 : i32
    %167 = vector.broadcast %c7_i32_61 : i32 to vector<16x8x8xi32>
    %168 = arith.cmpi eq, %116, %167 : vector<16x8x8xi32>
    %cst_62 = arith.constant 0.000000e+00 : f32
    %169 = vector.broadcast %cst_62 : f32 to vector<16x8x8xf32>
    %170 = arith.select %168, %169, %166 : vector<16x8x8xi1>, vector<16x8x8xf32>
    %171 = vector.extract_strided_slice %140 {offsets = [1, 0, 0], sizes = [15, 8, 8], strides = [1, 1, 1]} : vector<16x8x8xf32> to vector<15x8x8xf32>
    %172 = tpu.concatenate %171, %98 in 0 : vector<15x8x8xf32>, vector<1x8x8xf32> -> vector<16x8x8xf32>
    %c7_i32_63 = arith.constant 7 : i32
    %173 = vector.broadcast %c7_i32_63 : i32 to vector<16x8x8xi32>
    %174 = arith.cmpi eq, %116, %173 : vector<16x8x8xi32>
    %cst_64 = arith.constant 0.000000e+00 : f32
    %175 = vector.broadcast %cst_64 : f32 to vector<16x8x8xf32>
    %176 = arith.select %174, %175, %172 : vector<16x8x8xi1>, vector<16x8x8xf32>
    %177 = tpu.concatenate %146, %152, %158, %128, %97, %140, %164, %170, %176 in 2 : vector<16x8x8xf32>, vector<16x8x8xf32>, vector<16x8x8xf32>, vector<16x8x8xf32>, vector<16x8x8xf32>, vector<16x8x8xf32>, vector<16x8x8xf32>, vector<16x8x8xf32>, vector<16x8x8xf32> -> vector<16x8x72xf32>
    %178 = vector.shape_cast %177 : vector<16x8x72xf32> to vector<128x72xf32>
    %c0_65 = arith.constant 0 : index
    %c0_66 = arith.constant 0 : index
    %179 = vector.load %arg4[%c0_65, %c0_66] : memref<72x8xf32, #tpu.memory_space<vmem>>, vector<72x8xf32>
    %cst_67 = arith.constant dense<0.000000e+00> : vector<128x8xf32>
    %180 = tpu.matmul %178, %179, %cst_67 {dimension_numbers = #tpu.dot_dimension_numbers<[1], [0], [0], [1], [0, 0, 1, 1], [], []>} : vector<128x72xf32>, vector<72x8xf32>, vector<128x8xf32> -> vector<128x8xf32>
    %c0_68 = arith.constant 0 : index
    %c0_69 = arith.constant 0 : index
    %181 = vector.load %arg5[%c0_68, %c0_69] : memref<1x8xf32, #tpu.memory_space<vmem>>, vector<1x8xf32>
    %182 = vector.broadcast %181 : vector<1x8xf32> to vector<128x8xf32>
    %183 = arith.addf %180, %182 : vector<128x8xf32>
    %cst_70 = arith.constant 0.000000e+00 : f32
    %184 = vector.broadcast %cst_70 : f32 to vector<128x8xf32>
    %185 = arith.maximumf %183, %184 : vector<128x8xf32>
    %186 = vector.extract_strided_slice %185 {offsets = [0, 0], sizes = [64, 8], strides = [1, 1]} : vector<128x8xf32> to vector<64x8xf32>
    %187 = tpu.transpose %186, [1, 0] : vector<64x8xf32> -> vector<8x64xf32>
    %c0_71 = arith.constant 0 : index
    %c0_72 = arith.constant 0 : index
    %c0_73 = arith.constant 0 : index
    %188 = vector.load %arg6[%c0_71, %c0_72, %c0_73] : memref<2x8x64xf32, #tpu.memory_space<vmem>>, vector<1x8x64xf32>
    %189 = vector.shape_cast %188 : vector<1x8x64xf32> to vector<8x64xf32>
    %190 = vector.shape_cast %187 : vector<8x64xf32> to vector<1x8x64xf32>
    tpu.vector_store %arg6[%c0_71, %c0_72, %c0_73], %190 {strides = array<i32>} : memref<2x8x64xf32, #tpu.memory_space<vmem>>, vector<1x8x64xf32>,
    %191 = vector.extract_strided_slice %185 {offsets = [64, 0], sizes = [64, 8], strides = [1, 1]} : vector<128x8xf32> to vector<64x8xf32>
    %192 = tpu.transpose %191, [1, 0] : vector<64x8xf32> -> vector<8x64xf32>
    %c1 = arith.constant 1 : index
    %c0_74 = arith.constant 0 : index
    %c0_75 = arith.constant 0 : index
    %193 = vector.load %arg6[%c1, %c0_74, %c0_75] : memref<2x8x64xf32, #tpu.memory_space<vmem>>, vector<1x8x64xf32>
    %194 = vector.shape_cast %193 : vector<1x8x64xf32> to vector<8x64xf32>
    %195 = vector.shape_cast %192 : vector<8x64xf32> to vector<1x8x64xf32>
    tpu.vector_store %arg6[%c1, %c0_74, %c0_75], %195 {strides = array<i32>} : memref<2x8x64xf32, #tpu.memory_space<vmem>>, vector<1x8x64xf32>,
    return
  }
  func.func @transform_0(%arg0: i32) -> (i32, i32, i32, i32) {
    %c0_i32 = arith.constant 0 : i32
    %c0_i32_0 = arith.constant 0 : i32
    %c0_i32_1 = arith.constant 0 : i32
    %c0_i32_2 = arith.constant 0 : i32
    return %arg0, %c0_i32, %c0_i32_0, %c0_i32_1 : i32, i32, i32, i32
  }
  func.func @transform_1(%arg0: i32) -> (i32, i32) {
    %c0_i32 = arith.constant 0 : i32
    %c0_i32_0 = arith.constant 0 : i32
    %c0_i32_1 = arith.constant 0 : i32
    return %c0_i32, %c0_i32_0 : i32, i32
  }
  func.func @transform_2(%arg0: i32) -> (i32, i32) {
    %c0_i32 = arith.constant 0 : i32
    %c0_i32_0 = arith.constant 0 : i32
    %c0_i32_1 = arith.constant 0 : i32
    return %c0_i32, %c0_i32_0 : i32, i32
  }
  func.func @transform_3(%arg0: i32) -> (i32, i32) {
    %c0_i32 = arith.constant 0 : i32
    %c0_i32_0 = arith.constant 0 : i32
    %c0_i32_1 = arith.constant 0 : i32
    return %c0_i32, %c0_i32_0 : i32, i32
  }
  func.func @transform_4(%arg0: i32) -> (i32, i32) {
    %c0_i32 = arith.constant 0 : i32
    %c0_i32_0 = arith.constant 0 : i32
    %c0_i32_1 = arith.constant 0 : i32
    return %c0_i32, %c0_i32_0 : i32, i32
  }
  func.func @transform_5(%arg0: i32) -> (i32, i32, i32) {
    %c0_i32 = arith.constant 0 : i32
    %c0_i32_0 = arith.constant 0 : i32
    %c0_i32_1 = arith.constant 0 : i32
    return %arg0, %c0_i32, %c0_i32_0 : i32, i32, i32
  }
}

</mosaic_0001>

<llo_original>
// kernel: tpu_custom_call.1
$region0: #{tpu_custom_call.1}
  #allocation0 [shape = 'u32[]', space=smem, size = 0x4, offset = 0x4, fixed_abs, tag = 'smem constant byte address 0x4 - core index']
  #allocation1 [shape = 'u32[144,128]{1,0:T(1,128)}', space=vmem, size = 0x12000, scoped, tag = 'internal scratch']
  %s0 = inlined_call_operand.hbm [shape: f32[16,2,8,8], index: 0, kind: input, shape index: {}]
  %s1 = inlined_call_operand.hbm [shape: f32[36,8], index: 1, kind: input, shape index: {}]
  %s2 = inlined_call_operand.hbm [shape: f32[1,8], index: 2, kind: input, shape index: {}]
  %s3 = inlined_call_operand.hbm [shape: f32[72,8], index: 3, kind: input, shape index: {}]
  %s4 = inlined_call_operand.hbm [shape: f32[1,8], index: 4, kind: input, shape index: {}]
  %s5 = inlined_call_operand.hbm [shape: f32[2,8,64], index: 5, kind: output, shape index: {}]
  %s6 = sld [smem:[#allocation0]]
  $region50: #{tpu_custom_call.1} parent=0
    _
  %s8 = ssub.s32 1, %s6
  %s9 = scalar_select 0, %s8, %s6
  $region1: #{tpu_custom_call.1} parent=0
    #allocation2 [shape = 'u8[131072]{0}', space=vmem, size = 0x20000, scoped, tag = 'input window, operand 0, single buffered']
    #allocation3 [shape = 's32[1]{0}', space=sflag, size = 0x4, scoped, tag = 'scoped memory for tpu_custom_call.1']
    #allocation4 [shape = 's32[1]{0}', space=sflag, size = 0x4, scoped, tag = 'scoped memory for tpu_custom_call.1']
    #allocation5 [shape = 'u8[20480]{0}', space=vmem, size = 0x5000, scoped, tag = 'input window, operand 1, single buffered']
    #allocation6 [shape = 's32[1]{0}', space=sflag, size = 0x4, scoped, tag = 'scoped memory for tpu_custom_call.1']
    #allocation7 [shape = 'u8[512]{0}', space=vmem, size = 0x400, scoped, tag = 'input window, operand 2, single buffered']
    #allocation8 [shape = 'u8[36864]{0}', space=vmem, size = 0x9000, scoped, tag = 'input window, operand 3, single buffered']
    #allocation9 [shape = 's32[1]{0}', space=sflag, size = 0x4, scoped, tag = 'scoped memory for tpu_custom_call.1']
    #allocation10 [shape = 'u8[512]{0}', space=vmem, size = 0x400, scoped, tag = 'input window, operand 4, single buffered']
    #allocation11 [shape = 'u8[8192]{0}', space=vmem, size = 0x2000, scoped, tag = 'output window, operand 0, single buffered']
    %10 = vsyncpa [#allocation3], 0
    %11 = vsyncpa [#allocation6], 0
    %12 = vsyncpa [#allocation9], 0
    %13 = vsyncpa [#allocation4], 0
    // Predicated region
    $region2: #{tpu_custom_call.1} parent=1 // pred_check
      _
    $region3: #{tpu_custom_call.1} parent=1 // pred_check_branch
      %15 = sbr.rel (0) target = $region5
    $region4: #{tpu_custom_call.1} parent=1 // pred_region
      %s17 = ssub.s32 4096, 4096
      %18 = vsyncadd [#allocation3], %s17
      %s19 = sshll.u32 [#allocation2], 4
      %s20 = int_to_ptr.vmem [resolvable:$true] %s19
      %25 = dma.hbm_to_vmem [thread:$0]  %s0, 4096, %s20, [#allocation3], 128, 128, 8
    $region5: #{tpu_custom_call.1} parent=1 // pred_fallthru
      _
    // Predicated region
    $region6: #{tpu_custom_call.1} parent=1 // pred_check
      _
    $region7: #{tpu_custom_call.1} parent=1 // pred_check_branch
      %27 = sbr.rel (0) target = $region9
    $region8: #{tpu_custom_call.1} parent=1 // pred_region
      %s29 = ssub.s32 640, 640
      %30 = vsyncadd [#allocation6], %s29
      %s31 = sshll.u32 [#allocation5], 4
      %s32 = int_to_ptr.vmem [resolvable:$true] %s31
      %37 = dma.hbm_to_vmem [thread:$0]  %s1, 640, %s32, [#allocation6], 128, 128, 8
    $region9: #{tpu_custom_call.1} parent=1 // pred_fallthru
      _
    // Predicated region
    $region10: #{tpu_custom_call.1} parent=1 // pred_check
      _
    $region11: #{tpu_custom_call.1} parent=1 // pred_check_branch
      %39 = sbr.rel (0) target = $region13
    $region12: #{tpu_custom_call.1} parent=1 // pred_region
      %s41 = ssub.s32 16, 16
      %42 = vsyncadd [#allocation6], %s41
      %s44 = sshll.u32 [#allocation7], 4
      %s45 = int_to_ptr.vmem [resolvable:$true] %s44
      %47 = dma.hbm_to_vmem [thread:$0]  %s2, 16, %s45, [#allocation6]
    $region13: #{tpu_custom_call.1} parent=1 // pred_fallthru
      _
    // Predicated region
    $region14: #{tpu_custom_call.1} parent=1 // pred_check
      _
    $region15: #{tpu_custom_call.1} parent=1 // pred_check_branch
      %49 = sbr.rel (0) target = $region17
    $region16: #{tpu_custom_call.1} parent=1 // pred_region
      %s51 = ssub.s32 1152, 1152
      %52 = vsyncadd [#allocation9], %s51
      %s53 = sshll.u32 [#allocation8], 4
      %s54 = int_to_ptr.vmem [resolvable:$true] %s53
      %59 = dma.hbm_to_vmem [thread:$0]  %s3, 1152, %s54, [#allocation9], 128, 128, 8
    $region17: #{tpu_custom_call.1} parent=1 // pred_fallthru
      _
    // Predicated region
    $region18: #{tpu_custom_call.1} parent=1 // pred_check
      _
    $region19: #{tpu_custom_call.1} parent=1 // pred_check_branch
      %61 = sbr.rel (0) target = $region21
    $region20: #{tpu_custom_call.1} parent=1 // pred_region
      %s63 = ssub.s32 16, 16
      %64 = vsyncadd [#allocation9], %s63
      %s66 = sshll.u32 [#allocation10], 4
      %s67 = int_to_ptr.vmem [resolvable:$true] %s66
      %69 = dma.hbm_to_vmem [thread:$0]  %s4, 16, %s67, [#allocation9]
    $region21: #{tpu_custom_call.1} parent=1 // pred_fallthru
      _
    // Predicated region
    $region22: #{tpu_custom_call.1} parent=1 // pred_check
      _
    $region23: #{tpu_custom_call.1} parent=1 // pred_check_branch
      %71 = sbr.rel (0) target = $region25
    $region24: #{tpu_custom_call.1} parent=1 // pred_region
      %72 = dma.done [#allocation3], 4096
    $region25: #{tpu_custom_call.1} parent=1 // pred_fallthru
      _
    // Predicated region
    $region26: #{tpu_custom_call.1} parent=1 // pred_check
      _
    $region27: #{tpu_custom_call.1} parent=1 // pred_check_branch
      %74 = sbr.rel (0) target = $region29
    $region28: #{tpu_custom_call.1} parent=1 // pred_region
      %75 = dma.done [#allocation6], 640
    $region29: #{tpu_custom_call.1} parent=1 // pred_fallthru
      _
    // Predicated region
    $region30: #{tpu_custom_call.1} parent=1 // pred_check
      _
    $region31: #{tpu_custom_call.1} parent=1 // pred_check_branch
      %77 = sbr.rel (0) target = $region33
    $region32: #{tpu_custom_call.1} parent=1 // pred_region
      %78 = dma.done [#allocation6], 16
    $region33: #{tpu_custom_call.1} parent=1 // pred_fallthru
      _
    // Predicated region
    $region34: #{tpu_custom_call.1} parent=1 // pred_check
      _
    $region35: #{tpu_custom_call.1} parent=1 // pred_check_branch
      %80 = sbr.rel (0) target = $region37
    $region36: #{tpu_custom_call.1} parent=1 // pred_region
      %81 = dma.done [#allocation9], 1152
    $region37: #{tpu_custom_call.1} parent=1 // pred_fallthru
      _
    // Predicated region
    $region38: #{tpu_custom_call.1} parent=1 // pred_check
      _
    $region39: #{tpu_custom_call.1} parent=1 // pred_check_branch
      %83 = sbr.rel (0) target = $region41
    $region40: #{tpu_custom_call.1} parent=1 // pred_region
      %84 = dma.done [#allocation9], 16
    $region41: #{tpu_custom_call.1} parent=1 // pred_fallthru
      _
    %v85 = vld [vmem:[#allocation2] sm:$0xff]
    %v86 = vld [vmem:[#allocation2 + $0x8] sm:$0xff]
    %v87 = vld [vmem:[#allocation2 + $0x10] sm:$0xff]
    %v88 = vld [vmem:[#allocation2 + $0x18] sm:$0xff]
    %v89 = vld [vmem:[#allocation2 + $0x20] sm:$0xff]
    %v90 = vld [vmem:[#allocation2 + $0x28] sm:$0xff]
    %v91 = vld [vmem:[#allocation2 + $0x30] sm:$0xff]
    %v92 = vld [vmem:[#allocation2 + $0x38] sm:$0xff]
    %v93 = vld [vmem:[#allocation2 + $0x40] sm:$0xff]
    %v94 = vld [vmem:[#allocation2 + $0x48] sm:$0xff]
    %v95 = vld [vmem:[#allocation2 + $0x50] sm:$0xff]
    %v96 = vld [vmem:[#allocation2 + $0x58] sm:$0xff]
    %v97 = vld [vmem:[#allocation2 + $0x60] sm:$0xff]
    %v98 = vld [vmem:[#allocation2 + $0x68] sm:$0xff]
    %v99 = vld [vmem:[#allocation2 + $0x70] sm:$0xff]
    %v100 = vld [vmem:[#allocation2 + $0x78] sm:$0xff]
    %v101 = vld [vmem:[#allocation2 + $0x80] sm:$0xff]
    %v102 = vld [vmem:[#allocation2 + $0x88] sm:$0xff]
    %v103 = vld [vmem:[#allocation2 + $0x90] sm:$0xff]
    %v104 = vld [vmem:[#allocation2 + $0x98] sm:$0xff]
    %v105 = vld [vmem:[#allocation2 + $0xa0] sm:$0xff]
    %v106 = vld [vmem:[#allocation2 + $0xa8] sm:$0xff]
    %v107 = vld [vmem:[#allocation2 + $0xb0] sm:$0xff]
    %v108 = vld [vmem:[#allocation2 + $0xb8] sm:$0xff]
    %v109 = vld [vmem:[#allocation2 + $0xc0] sm:$0xff]
    %v110 = vld [vmem:[#allocation2 + $0xc8] sm:$0xff]
    %v111 = vld [vmem:[#allocation2 + $0xd0] sm:$0xff]
    %v112 = vld [vmem:[#allocation2 + $0xd8] sm:$0xff]
    %v113 = vld [vmem:[#allocation2 + $0xe0] sm:$0xff]
    %v114 = vld [vmem:[#allocation2 + $0xe8] sm:$0xff]
    %v115 = vld [vmem:[#allocation2 + $0xf0] sm:$0xff]
    %v116 = vld [vmem:[#allocation2 + $0xf8] sm:$0xff]
    %v117 = vmax.f32 %v85, %v86
    %v118 = vmax.f32 %v87, %v88
    %v119 = vmax.f32 %v89, %v90
    %v120 = vmax.f32 %v91, %v92
    %v121 = vmax.f32 %v93, %v94
    %v122 = vmax.f32 %v95, %v96
    %v123 = vmax.f32 %v97, %v98
    %v124 = vmax.f32 %v99, %v100
    %v125 = vmax.f32 %v101, %v102
    %v126 = vmax.f32 %v103, %v104
    %v127 = vmax.f32 %v105, %v106
    %v128 = vmax.f32 %v107, %v108
    %v129 = vmax.f32 %v109, %v110
    %v130 = vmax.f32 %v111, %v112
    %v131 = vmax.f32 %v113, %v114
    %v132 = vmax.f32 %v115, %v116
    %149 = vrot.lane.b32.xlu0 %v117, 124
    %v150 = vpop.permute.xlu0 %149
    %151 = vrot.lane.b32.xlu0 %v118, 124
    %v152 = vpop.permute.xlu0 %151
    %153 = vrot.lane.b32.xlu0 %v119, 124
    %v154 = vpop.permute.xlu0 %153
    %155 = vrot.lane.b32.xlu0 %v120, 124
    %v156 = vpop.permute.xlu0 %155
    %157 = vrot.lane.b32.xlu0 %v121, 124
    %v158 = vpop.permute.xlu0 %157
    %159 = vrot.lane.b32.xlu0 %v122, 124
    %v160 = vpop.permute.xlu0 %159
    %161 = vrot.lane.b32.xlu0 %v123, 124
    %v162 = vpop.permute.xlu0 %161
    %163 = vrot.lane.b32.xlu0 %v124, 124
    %v164 = vpop.permute.xlu0 %163
    %165 = vrot.lane.b32.xlu0 %v125, 124
    %v166 = vpop.permute.xlu0 %165
    %167 = vrot.lane.b32.xlu0 %v126, 124
    %v168 = vpop.permute.xlu0 %167
    %169 = vrot.lane.b32.xlu0 %v127, 124
    %v170 = vpop.permute.xlu0 %169
    %171 = vrot.lane.b32.xlu0 %v128, 124
    %v172 = vpop.permute.xlu0 %171
    %173 = vrot.lane.b32.xlu0 %v129, 124
    %v174 = vpop.permute.xlu0 %173
    %175 = vrot.lane.b32.xlu0 %v130, 124
    %v176 = vpop.permute.xlu0 %175
    %177 = vrot.lane.b32.xlu0 %v131, 124
    %v178 = vpop.permute.xlu0 %177
    %179 = vrot.lane.b32.xlu0 %v132, 124
    %v180 = vpop.permute.xlu0 %179
    %v197 = vmax.f32 %v117, %v150
    %v198 = vmax.f32 %v118, %v152
    %v199 = vmax.f32 %v119, %v154
    %v200 = vmax.f32 %v120, %v156
    %v201 = vmax.f32 %v121, %v158
    %v202 = vmax.f32 %v122, %v160
    %v203 = vmax.f32 %v123, %v162
    %v204 = vmax.f32 %v124, %v164
    %v205 = vmax.f32 %v125, %v166
    %v206 = vmax.f32 %v126, %v168
    %v207 = vmax.f32 %v127, %v170
    %v208 = vmax.f32 %v128, %v172
    %v209 = vmax.f32 %v129, %v174
    %v210 = vmax.f32 %v130, %v176
    %v211 = vmax.f32 %v131, %v178
    %v212 = vmax.f32 %v132, %v180
    %v213 = vlaneseq
    %v214 = vshrl.u32 %v213, 7
    %v215 = vrot.slane %v197, 7
    %v216 = vrot.slane %v198, 7
    %v217 = vrot.slane %v199, 7
    %v218 = vrot.slane %v200, 7
    %v219 = vrot.slane %v201, 7
    %v220 = vrot.slane %v202, 7
    %v221 = vrot.slane %v203, 7
    %v222 = vrot.slane %v204, 7
    %v223 = vrot.slane %v205, 7
    %v224 = vrot.slane %v206, 7
    %v225 = vrot.slane %v207, 7
    %v226 = vrot.slane %v208, 7
    %v227 = vrot.slane %v209, 7
    %v228 = vrot.slane %v210, 7
    %v229 = vrot.slane %v211, 7
    %v230 = vrot.slane %v212, 7
    %v231 = vadd.s32 %v214, 4294967295
    %vm232 = vcmp.ge.s32.totalorder %v231, 0
    %vm233 = vcmp.lt.s32.totalorder %v231, 8
    %vm234 = vmand %vm232, %vm233
    %v235 = vsel %vm234, %v215, 0.0
    %v236 = vsel %vm234, %v216, 0.0
    %v237 = vsel %vm234, %v217, 0.0
    %v238 = vsel %vm234, %v218, 0.0
    %v239 = vsel %vm234, %v219, 0.0
    %v240 = vsel %vm234, %v220, 0.0
    %v241 = vsel %vm234, %v221, 0.0
    %v242 = vsel %vm234, %v222, 0.0
    %v243 = vsel %vm234, %v223, 0.0
    %v244 = vsel %vm234, %v224, 0.0
    %v245 = vsel %vm234, %v225, 0.0
    %v246 = vsel %vm234, %v226, 0.0
    %v247 = vsel %vm234, %v227, 0.0
    %v248 = vsel %vm234, %v228, 0.0
    %v249 = vsel %vm234, %v229, 0.0
    %v250 = vsel %vm234, %v230, 0.0
    %v251 = vrot.slane %v197, 1
    %v252 = vrot.slane %v198, 1
    %v253 = vrot.slane %v199, 1
    %v254 = vrot.slane %v200, 1
    %v255 = vrot.slane %v201, 1
    %v256 = vrot.slane %v202, 1
    %v257 = vrot.slane %v203, 1
    %v258 = vrot.slane %v204, 1
    %v259 = vrot.slane %v205, 1
    %v260 = vrot.slane %v206, 1
    %v261 = vrot.slane %v207, 1
    %v262 = vrot.slane %v208, 1
    %v263 = vrot.slane %v209, 1
    %v264 = vrot.slane %v210, 1
    %v265 = vrot.slane %v211, 1
    %v266 = vrot.slane %v212, 1
    %v267 = vadd.s32 %v214, 1
    %vm268 = vcmp.ge.s32.totalorder %v267, 0
    %vm269 = vcmp.lt.s32.totalorder %v267, 8
    %vm270 = vmand %vm268, %vm269
    %v271 = vsel %vm270, %v251, 0.0
    %v272 = vsel %vm270, %v252, 0.0
    %v273 = vsel %vm270, %v253, 0.0
    %v274 = vsel %vm270, %v254, 0.0
    %v275 = vsel %vm270, %v255, 0.0
    %v276 = vsel %vm270, %v256, 0.0
    %v277 = vsel %vm270, %v257, 0.0
    %v278 = vsel %vm270, %v258, 0.0
    %v279 = vsel %vm270, %v259, 0.0
    %v280 = vsel %vm270, %v260, 0.0
    %v281 = vsel %vm270, %v261, 0.0
    %v282 = vsel %vm270, %v262, 0.0
    %v283 = vsel %vm270, %v263, 0.0
    %v284 = vsel %vm270, %v264, 0.0
    %v285 = vsel %vm270, %v265, 0.0
    %v286 = vsel %vm270, %v266, 0.0
    %v287 = vsel 0, 0.0, %v235
    %v288 = vsel 0, 0.0, %v236
    %v289 = vsel 0, 0.0, %v237
    %v290 = vsel 0, 0.0, %v238
    %v291 = vsel 0, 0.0, %v239
    %v292 = vsel 0, 0.0, %v240
    %v293 = vsel 0, 0.0, %v241
    %v294 = vsel 1, 0.0, %v242
    %v295 = vsel 0, 0.0, %v243
    %v296 = vsel 0, 0.0, %v244
    %v297 = vsel 0, 0.0, %v245
    %v298 = vsel 0, 0.0, %v246
    %v299 = vsel 0, 0.0, %v247
    %v300 = vsel 0, 0.0, %v248
    %v301 = vsel 0, 0.0, %v249
    %v302 = vsel 0, 0.0, %v197
    %v303 = vsel 0, 0.0, %v198
    %v304 = vsel 0, 0.0, %v199
    %v305 = vsel 0, 0.0, %v200
    %v306 = vsel 0, 0.0, %v201
    %v307 = vsel 0, 0.0, %v202
    %v308 = vsel 0, 0.0, %v203
    %v309 = vsel 1, 0.0, %v204
    %v310 = vsel 0, 0.0, %v205
    %v311 = vsel 0, 0.0, %v206
    %v312 = vsel 0, 0.0, %v207
    %v313 = vsel 0, 0.0, %v208
    %v314 = vsel 0, 0.0, %v209
    %v315 = vsel 0, 0.0, %v210
    %v316 = vsel 0, 0.0, %v211
    %v317 = vsel 0, 0.0, %v271
    %v318 = vsel 0, 0.0, %v272
    %v319 = vsel 0, 0.0, %v273
    %v320 = vsel 0, 0.0, %v274
    %v321 = vsel 0, 0.0, %v275
    %v322 = vsel 0, 0.0, %v276
    %v323 = vsel 0, 0.0, %v277
    %v324 = vsel 1, 0.0, %v278
    %v325 = vsel 0, 0.0, %v279
    %v326 = vsel 0, 0.0, %v280
    %v327 = vsel 0, 0.0, %v281
    %v328 = vsel 0, 0.0, %v282
    %v329 = vsel 0, 0.0, %v283
    %v330 = vsel 0, 0.0, %v284
    %v331 = vsel 0, 0.0, %v285
    %v332 = vsel 0, 0.0, %v242
    %v333 = vsel 1, 0.0, %v243
    %v334 = vsel 0, 0.0, %v250
    %v335 = vsel 0, 0.0, %v204
    %v336 = vsel 1, 0.0, %v205
    %v337 = vsel 0, 0.0, %v212
    %v338 = vsel 0, 0.0, %v278
    %v339 = vsel 1, 0.0, %v279
    %v340 = vsel 0, 0.0, %v286
    %357 = vrot.lane.b32.xlu0 0.0, 4
    %v358 = vpop.permute.xlu0 %357
    %359 = vrot.lane.b32.xlu0 %v302, 4
    %v360 = vpop.permute.xlu0 %359
    %361 = vrot.lane.b32.xlu0 %v303, 4
    %v362 = vpop.permute.xlu0 %361
    %363 = vrot.lane.b32.xlu0 %v304, 4
    %v364 = vpop.permute.xlu0 %363
    %365 = vrot.lane.b32.xlu0 %v305, 4
    %v366 = vpop.permute.xlu0 %365
    %367 = vrot.lane.b32.xlu0 %v306, 4
    %v368 = vpop.permute.xlu0 %367
    %369 = vrot.lane.b32.xlu0 %v307, 4
    %v370 = vpop.permute.xlu0 %369
    %371 = vrot.lane.b32.xlu0 %v308, 4
    %v372 = vpop.permute.xlu0 %371
    %373 = vrot.lane.b32.xlu0 %v309, 4
    %v374 = vpop.permute.xlu0 %373
    %375 = vrot.lane.b32.xlu0 %v310, 4
    %v376 = vpop.permute.xlu0 %375
    %377 = vrot.lane.b32.xlu0 %v311, 4
    %v378 = vpop.permute.xlu0 %377
    %379 = vrot.lane.b32.xlu0 %v312, 4
    %v380 = vpop.permute.xlu0 %379
    %381 = vrot.lane.b32.xlu0 %v313, 4
    %v382 = vpop.permute.xlu0 %381
    %383 = vrot.lane.b32.xlu0 %v314, 4
    %v384 = vpop.permute.xlu0 %383
    %385 = vrot.lane.b32.xlu0 %v315, 4
    %v386 = vpop.permute.xlu0 %385
    %387 = vrot.lane.b32.xlu0 %v316, 4
    %v388 = vpop.permute.xlu0 %387
    %420 = vrot.lane.b32.xlu0 0.0, 8
    %v421 = vpop.permute.xlu0 %420
    %422 = vrot.lane.b32.xlu0 %v317, 8
    %v423 = vpop.permute.xlu0 %422
    %424 = vrot.lane.b32.xlu0 %v318, 8
    %v425 = vpop.permute.xlu0 %424
    %426 = vrot.lane.b32.xlu0 %v319, 8
    %v427 = vpop.permute.xlu0 %426
    %428 = vrot.lane.b32.xlu0 %v320, 8
    %v429 = vpop.permute.xlu0 %428
    %430 = vrot.lane.b32.xlu0 %v321, 8
    %v431 = vpop.permute.xlu0 %430
    %432 = vrot.lane.b32.xlu0 %v322, 8
    %v433 = vpop.permute.xlu0 %432
    %434 = vrot.lane.b32.xlu0 %v323, 8
    %v435 = vpop.permute.xlu0 %434
    %436 = vrot.lane.b32.xlu0 %v324, 8
    %v437 = vpop.permute.xlu0 %436
    %438 = vrot.lane.b32.xlu0 %v325, 8
    %v439 = vpop.permute.xlu0 %438
    %440 = vrot.lane.b32.xlu0 %v326, 8
    %v441 = vpop.permute.xlu0 %440
    %442 = vrot.lane.b32.xlu0 %v327, 8
    %v443 = vpop.permute.xlu0 %442
    %444 = vrot.lane.b32.xlu0 %v328, 8
    %v445 = vpop.permute.xlu0 %444
    %446 = vrot.lane.b32.xlu0 %v329, 8
    %v447 = vpop.permute.xlu0 %446
    %448 = vrot.lane.b32.xlu0 %v330, 8
    %v449 = vpop.permute.xlu0 %448
    %450 = vrot.lane.b32.xlu0 %v331, 8
    %v451 = vpop.permute.xlu0 %450
    %484 = vrot.lane.b32.xlu0 %v235, 12
    %v485 = vpop.permute.xlu0 %484
    %486 = vrot.lane.b32.xlu0 %v236, 12
    %v487 = vpop.permute.xlu0 %486
    %488 = vrot.lane.b32.xlu0 %v237, 12
    %v489 = vpop.permute.xlu0 %488
    %490 = vrot.lane.b32.xlu0 %v238, 12
    %v491 = vpop.permute.xlu0 %490
    %492 = vrot.lane.b32.xlu0 %v239, 12
    %v493 = vpop.permute.xlu0 %492
    %494 = vrot.lane.b32.xlu0 %v240, 12
    %v495 = vpop.permute.xlu0 %494
    %496 = vrot.lane.b32.xlu0 %v241, 12
    %v497 = vpop.permute.xlu0 %496
    %498 = vrot.lane.b32.xlu0 %v242, 12
    %v499 = vpop.permute.xlu0 %498
    %500 = vrot.lane.b32.xlu0 %v243, 12
    %v501 = vpop.permute.xlu0 %500
    %502 = vrot.lane.b32.xlu0 %v244, 12
    %v503 = vpop.permute.xlu0 %502
    %504 = vrot.lane.b32.xlu0 %v245, 12
    %v505 = vpop.permute.xlu0 %504
    %506 = vrot.lane.b32.xlu0 %v246, 12
    %v507 = vpop.permute.xlu0 %506
    %508 = vrot.lane.b32.xlu0 %v247, 12
    %v509 = vpop.permute.xlu0 %508
    %510 = vrot.lane.b32.xlu0 %v248, 12
    %v511 = vpop.permute.xlu0 %510
    %512 = vrot.lane.b32.xlu0 %v249, 12
    %v513 = vpop.permute.xlu0 %512
    %514 = vrot.lane.b32.xlu0 %v250, 12
    %v515 = vpop.permute.xlu0 %514
    %548 = vrot.lane.b32.xlu0 %v197, 16
    %v549 = vpop.permute.xlu0 %548
    %550 = vrot.lane.b32.xlu0 %v198, 16
    %v551 = vpop.permute.xlu0 %550
    %552 = vrot.lane.b32.xlu0 %v199, 16
    %v553 = vpop.permute.xlu0 %552
    %554 = vrot.lane.b32.xlu0 %v200, 16
    %v555 = vpop.permute.xlu0 %554
    %556 = vrot.lane.b32.xlu0 %v201, 16
    %v557 = vpop.permute.xlu0 %556
    %558 = vrot.lane.b32.xlu0 %v202, 16
    %v559 = vpop.permute.xlu0 %558
    %560 = vrot.lane.b32.xlu0 %v203, 16
    %v561 = vpop.permute.xlu0 %560
    %562 = vrot.lane.b32.xlu0 %v204, 16
    %v563 = vpop.permute.xlu0 %562
    %564 = vrot.lane.b32.xlu0 %v205, 16
    %v565 = vpop.permute.xlu0 %564
    %566 = vrot.lane.b32.xlu0 %v206, 16
    %v567 = vpop.permute.xlu0 %566
    %568 = vrot.lane.b32.xlu0 %v207, 16
    %v569 = vpop.permute.xlu0 %568
    %570 = vrot.lane.b32.xlu0 %v208, 16
    %v571 = vpop.permute.xlu0 %570
    %572 = vrot.lane.b32.xlu0 %v209, 16
    %v573 = vpop.permute.xlu0 %572
    %574 = vrot.lane.b32.xlu0 %v210, 16
    %v575 = vpop.permute.xlu0 %574
    %576 = vrot.lane.b32.xlu0 %v211, 16
    %v577 = vpop.permute.xlu0 %576
    %578 = vrot.lane.b32.xlu0 %v212, 16
    %v579 = vpop.permute.xlu0 %578
    %612 = vrot.lane.b32.xlu0 %v271, 20
    %v613 = vpop.permute.xlu0 %612
    %614 = vrot.lane.b32.xlu0 %v272, 20
    %v615 = vpop.permute.xlu0 %614
    %616 = vrot.lane.b32.xlu0 %v273, 20
    %v617 = vpop.permute.xlu0 %616
    %618 = vrot.lane.b32.xlu0 %v274, 20
    %v619 = vpop.permute.xlu0 %618
    %620 = vrot.lane.b32.xlu0 %v275, 20
    %v621 = vpop.permute.xlu0 %620
    %622 = vrot.lane.b32.xlu0 %v276, 20
    %v623 = vpop.permute.xlu0 %622
    %624 = vrot.lane.b32.xlu0 %v277, 20
    %v625 = vpop.permute.xlu0 %624
    %626 = vrot.lane.b32.xlu0 %v278, 20
    %v627 = vpop.permute.xlu0 %626
    %628 = vrot.lane.b32.xlu0 %v279, 20
    %v629 = vpop.permute.xlu0 %628
    %630 = vrot.lane.b32.xlu0 %v280, 20
    %v631 = vpop.permute.xlu0 %630
    %632 = vrot.lane.b32.xlu0 %v281, 20
    %v633 = vpop.permute.xlu0 %632
    %634 = vrot.lane.b32.xlu0 %v282, 20
    %v635 = vpop.permute.xlu0 %634
    %636 = vrot.lane.b32.xlu0 %v283, 20
    %v637 = vpop.permute.xlu0 %636
    %638 = vrot.lane.b32.xlu0 %v284, 20
    %v639 = vpop.permute.xlu0 %638
    %640 = vrot.lane.b32.xlu0 %v285, 20
    %v641 = vpop.permute.xlu0 %640
    %642 = vrot.lane.b32.xlu0 %v286, 20
    %v643 = vpop.permute.xlu0 %642
    %675 = vrot.lane.b32.xlu0 %v288, 24
    %v676 = vpop.permute.xlu0 %675
    %677 = vrot.lane.b32.xlu0 %v289, 24
    %v678 = vpop.permute.xlu0 %677
    %679 = vrot.lane.b32.xlu0 %v290, 24
    %v680 = vpop.permute.xlu0 %679
    %681 = vrot.lane.b32.xlu0 %v291, 24
    %v682 = vpop.permute.xlu0 %681
    %683 = vrot.lane.b32.xlu0 %v292, 24
    %v684 = vpop.permute.xlu0 %683
    %685 = vrot.lane.b32.xlu0 %v293, 24
    %v686 = vpop.permute.xlu0 %685
    %687 = vrot.lane.b32.xlu0 %v332, 24
    %v688 = vpop.permute.xlu0 %687
    %689 = vrot.lane.b32.xlu0 %v333, 24
    %v690 = vpop.permute.xlu0 %689
    %691 = vrot.lane.b32.xlu0 %v296, 24
    %v692 = vpop.permute.xlu0 %691
    %693 = vrot.lane.b32.xlu0 %v297, 24
    %v694 = vpop.permute.xlu0 %693
    %695 = vrot.lane.b32.xlu0 %v298, 24
    %v696 = vpop.permute.xlu0 %695
    %697 = vrot.lane.b32.xlu0 %v299, 24
    %v698 = vpop.permute.xlu0 %697
    %699 = vrot.lane.b32.xlu0 %v300, 24
    %v700 = vpop.permute.xlu0 %699
    %701 = vrot.lane.b32.xlu0 %v301, 24
    %v702 = vpop.permute.xlu0 %701
    %703 = vrot.lane.b32.xlu0 %v334, 24
    %v704 = vpop.permute.xlu0 %703
    %705 = vrot.lane.b32.xlu0 0.0, 24
    %v706 = vpop.permute.xlu0 %705
    %726 = vrot.lane.b32.xlu0 %v303, 28
    %v727 = vpop.permute.xlu0 %726
    %728 = vrot.lane.b32.xlu0 %v304, 28
    %v729 = vpop.permute.xlu0 %728
    %730 = vrot.lane.b32.xlu0 %v305, 28
    %v731 = vpop.permute.xlu0 %730
    %732 = vrot.lane.b32.xlu0 %v306, 28
    %v733 = vpop.permute.xlu0 %732
    %734 = vrot.lane.b32.xlu0 %v307, 28
    %v735 = vpop.permute.xlu0 %734
    %736 = vrot.lane.b32.xlu0 %v308, 28
    %v737 = vpop.permute.xlu0 %736
    %738 = vrot.lane.b32.xlu0 %v335, 28
    %v739 = vpop.permute.xlu0 %738
    %740 = vrot.lane.b32.xlu0 %v336, 28
    %v741 = vpop.permute.xlu0 %740
    %742 = vrot.lane.b32.xlu0 %v311, 28
    %v743 = vpop.permute.xlu0 %742
    %744 = vrot.lane.b32.xlu0 %v312, 28
    %v745 = vpop.permute.xlu0 %744
    %746 = vrot.lane.b32.xlu0 %v313, 28
    %v747 = vpop.permute.xlu0 %746
    %748 = vrot.lane.b32.xlu0 %v314, 28
    %v749 = vpop.permute.xlu0 %748
    %750 = vrot.lane.b32.xlu0 %v315, 28
    %v751 = vpop.permute.xlu0 %750
    %752 = vrot.lane.b32.xlu0 %v316, 28
    %v753 = vpop.permute.xlu0 %752
    %754 = vrot.lane.b32.xlu0 %v337, 28
    %v755 = vpop.permute.xlu0 %754
    %756 = vrot.lane.b32.xlu0 0.0, 28
    %v757 = vpop.permute.xlu0 %756
    %777 = vrot.lane.b32.xlu0 %v318, 32
    %v778 = vpop.permute.xlu0 %777
    %779 = vrot.lane.b32.xlu0 %v319, 32
    %v780 = vpop.permute.xlu0 %779
    %781 = vrot.lane.b32.xlu0 %v320, 32
    %v782 = vpop.permute.xlu0 %781
    %783 = vrot.lane.b32.xlu0 %v321, 32
    %v784 = vpop.permute.xlu0 %783
    %785 = vrot.lane.b32.xlu0 %v322, 32
    %v786 = vpop.permute.xlu0 %785
    %787 = vrot.lane.b32.xlu0 %v323, 32
    %v788 = vpop.permute.xlu0 %787
    %789 = vrot.lane.b32.xlu0 %v338, 32
    %v790 = vpop.permute.xlu0 %789
    %791 = vrot.lane.b32.xlu0 %v339, 32
    %v792 = vpop.permute.xlu0 %791
    %793 = vrot.lane.b32.xlu0 %v326, 32
    %v794 = vpop.permute.xlu0 %793
    %795 = vrot.lane.b32.xlu0 %v327, 32
    %v796 = vpop.permute.xlu0 %795
    %797 = vrot.lane.b32.xlu0 %v328, 32
    %v798 = vpop.permute.xlu0 %797
    %799 = vrot.lane.b32.xlu0 %v329, 32
    %v800 = vpop.permute.xlu0 %799
    %801 = vrot.lane.b32.xlu0 %v330, 32
    %v802 = vpop.permute.xlu0 %801
    %803 = vrot.lane.b32.xlu0 %v331, 32
    %v804 = vpop.permute.xlu0 %803
    %805 = vrot.lane.b32.xlu0 %v340, 32
    %v806 = vpop.permute.xlu0 %805
    %807 = vrot.lane.b32.xlu0 0.0, 32
    %v808 = vpop.permute.xlu0 %807
    %vm825 = vcmask 31744
    %v826 = vsel %vm825, 0.0, %v358
    %v827 = vsel %vm825, %v287, %v360
    %v828 = vsel %vm825, %v288, %v362
    %v829 = vsel %vm825, %v289, %v364
    %v830 = vsel %vm825, %v290, %v366
    %v831 = vsel %vm825, %v291, %v368
    %v832 = vsel %vm825, %v292, %v370
    %v833 = vsel %vm825, %v293, %v372
    %v834 = vsel %vm825, %v294, %v374
    %v835 = vsel %vm825, %v295, %v376
    %v836 = vsel %vm825, %v296, %v378
    %v837 = vsel %vm825, %v297, %v380
    %v838 = vsel %vm825, %v298, %v382
    %v839 = vsel %vm825, %v299, %v384
    %v840 = vsel %vm825, %v300, %v386
    %v841 = vsel %vm825, %v301, %v388
    %vm842 = vcmask 64512
    %v843 = vsel %vm842, %v826, %v421
    %v844 = vsel %vm842, %v827, %v423
    %v845 = vsel %vm842, %v828, %v425
    %v846 = vsel %vm842, %v829, %v427
    %v847 = vsel %vm842, %v830, %v429
    %v848 = vsel %vm842, %v831, %v431
    %v849 = vsel %vm842, %v832, %v433
    %v850 = vsel %vm842, %v833, %v435
    %v851 = vsel %vm842, %v834, %v437
    %v852 = vsel %vm842, %v835, %v439
    %v853 = vsel %vm842, %v836, %v441
    %v854 = vsel %vm842, %v837, %v443
    %v855 = vsel %vm842, %v838, %v445
    %v856 = vsel %vm842, %v839, %v447
    %v857 = vsel %vm842, %v840, %v449
    %v858 = vsel %vm842, %v841, %v451
    %vm859 = vcmask 97280
    %v860 = vsel %vm859, %v843, %v485
    %v861 = vsel %vm859, %v844, %v487
    %v862 = vsel %vm859, %v845, %v489
    %v863 = vsel %vm859, %v846, %v491
    %v864 = vsel %vm859, %v847, %v493
    %v865 = vsel %vm859, %v848, %v495
    %v866 = vsel %vm859, %v849, %v497
    %v867 = vsel %vm859, %v850, %v499
    %v868 = vsel %vm859, %v851, %v501
    %v869 = vsel %vm859, %v852, %v503
    %v870 = vsel %vm859, %v853, %v505
    %v871 = vsel %vm859, %v854, %v507
    %v872 = vsel %vm859, %v855, %v509
    %v873 = vsel %vm859, %v856, %v511
    %v874 = vsel %vm859, %v857, %v513
    %v875 = vsel %vm859, %v858, %v515
    %vm876 = vcmask 130048
    %v877 = vsel %vm876, %v860, %v549
    %v878 = vsel %vm876, %v861, %v551
    %v879 = vsel %vm876, %v862, %v553
    %v880 = vsel %vm876, %v863, %v555
    %v881 = vsel %vm876, %v864, %v557
    %v882 = vsel %vm876, %v865, %v559
    %v883 = vsel %vm876, %v866, %v561
    %v884 = vsel %vm876, %v867, %v563
    %v885 = vsel %vm876, %v868, %v565
    %v886 = vsel %vm876, %v869, %v567
    %v887 = vsel %vm876, %v870, %v569
    %v888 = vsel %vm876, %v871, %v571
    %v889 = vsel %vm876, %v872, %v573
    %v890 = vsel %vm876, %v873, %v575
    %v891 = vsel %vm876, %v874, %v577
    %v892 = vsel %vm876, %v875, %v579
    %vm893 = vcmask 162816
    %v894 = vsel %vm893, %v877, %v613
    %v895 = vsel %vm893, %v878, %v615
    %v896 = vsel %vm893, %v879, %v617
    %v897 = vsel %vm893, %v880, %v619
    %v898 = vsel %vm893, %v881, %v621
    %v899 = vsel %vm893, %v882, %v623
    %v900 = vsel %vm893, %v883, %v625
    %v901 = vsel %vm893, %v884, %v627
    %v902 = vsel %vm893, %v885, %v629
    %v903 = vsel %vm893, %v886, %v631
    %v904 = vsel %vm893, %v887, %v633
    %v905 = vsel %vm893, %v888, %v635
    %v906 = vsel %vm893, %v889, %v637
    %v907 = vsel %vm893, %v890, %v639
    %v908 = vsel %vm893, %v891, %v641
    %v909 = vsel %vm893, %v892, %v643
    %vm910 = vcmask 195584
    %v911 = vsel %vm910, %v894, %v676
    %v912 = vsel %vm910, %v895, %v678
    %v913 = vsel %vm910, %v896, %v680
    %v914 = vsel %vm910, %v897, %v682
    %v915 = vsel %vm910, %v898, %v684
    %v916 = vsel %vm910, %v899, %v686
    %v917 = vsel %vm910, %v900, %v688
    %v918 = vsel %vm910, %v901, %v690
    %v919 = vsel %vm910, %v902, %v692
    %v920 = vsel %vm910, %v903, %v694
    %v921 = vsel %vm910, %v904, %v696
    %v922 = vsel %vm910, %v905, %v698
    %v923 = vsel %vm910, %v906, %v700
    %v924 = vsel %vm910, %v907, %v702
    %v925 = vsel %vm910, %v908, %v704
    %v926 = vsel %vm910, %v909, %v706
    %vm927 = vcmask 228352
    %v928 = vsel %vm927, %v911, %v727
    %v929 = vsel %vm927, %v912, %v729
    %v930 = vsel %vm927, %v913, %v731
    %v931 = vsel %vm927, %v914, %v733
    %v932 = vsel %vm927, %v915, %v735
    %v933 = vsel %vm927, %v916, %v737
    %v934 = vsel %vm927, %v917, %v739
    %v935 = vsel %vm927, %v918, %v741
    %v936 = vsel %vm927, %v919, %v743
    %v937 = vsel %vm927, %v920, %v745
    %v938 = vsel %vm927, %v921, %v747
    %v939 = vsel %vm927, %v922, %v749
    %v940 = vsel %vm927, %v923, %v751
    %v941 = vsel %vm927, %v924, %v753
    %v942 = vsel %vm927, %v925, %v755
    %v943 = vsel %vm927, %v926, %v757
    %vm944 = vcmask 261120
    %v945 = vsel %vm944, %v928, %v778
    %v946 = vsel %vm944, %v929, %v780
    %v947 = vsel %vm944, %v930, %v782
    %v948 = vsel %vm944, %v931, %v784
    %v949 = vsel %vm944, %v932, %v786
    %v950 = vsel %vm944, %v933, %v788
    %v951 = vsel %vm944, %v934, %v790
    %v952 = vsel %vm944, %v935, %v792
    %v953 = vsel %vm944, %v936, %v794
    %v954 = vsel %vm944, %v937, %v796
    %v955 = vsel %vm944, %v938, %v798
    %v956 = vsel %vm944, %v939, %v800
    %v957 = vsel %vm944, %v940, %v802
    %v958 = vsel %vm944, %v941, %v804
    %v959 = vsel %vm944, %v942, %v806
    %v960 = vsel %vm944, %v943, %v808
    %v961 = vld [vmem:[#allocation5] sm:$0xff]
    %v962 = vld [vmem:[#allocation5 + $0x8] sm:$0xff]
    %v963 = vld [vmem:[#allocation5 + $0x10] sm:$0xff]
    %v964 = vld [vmem:[#allocation5 + $0x18] sm:$0xff]
    %v965 = vld [vmem:[#allocation5 + $0x20] sm:$0xf]
    %v966 = vld [vmem:[#allocation7] sm:$0x1]
    %v968 = vlaneseq
    %v969 = vshrl.u32 %v968, 7
    %v970 = vsub.s32 0, %v969
    %v971 = vrot.slane %v966, %v970
    %vm973 = vcmask 293888
    %v975 = vsel %vm973, %v945, 0
    %v978 = vsel %vm973, %v946, 0
    %v981 = vsel %vm973, %v947, 0
    %v984 = vsel %vm973, %v948, 0
    %v987 = vsel %vm973, %v949, 0
    %v990 = vsel %vm973, %v950, 0
    %v993 = vsel %vm973, %v951, 0
    %v996 = vsel %vm973, %v952, 0
    %v999 = vsel %vm973, %v953, 0
    %v1002 = vsel %vm973, %v954, 0
    %v1005 = vsel %vm973, %v955, 0
    %v1008 = vsel %vm973, %v956, 0
    %v1011 = vsel %vm973, %v957, 0
    %v1014 = vsel %vm973, %v958, 0
    %v1017 = vsel %vm973, %v959, 0
    %v1020 = vsel %vm973, %v960, 0
    %vm1022 = vcmask 1043456
    %v1024 = vsel %vm1022, %v965, 0
    %1026 = vmatprep.subr.mxu0 0.0
    %1027 = vmatpush1.msra.mxu0 %v961
    %1028 = vmatprep.subr.mxu0 0.0
    %1029 = vmatpush1.msra.mxu0 %v962
    %1030 = vmatprep.subr.mxu0 0.0
    %1031 = vmatpush1.msra.mxu0 %v963
    %1032 = vmatprep.subr.mxu0 0.0
    %1033 = vmatpush1.msra.mxu0 %v964
    %1034 = vmatprep.subr.mxu0 0.0
    %1035 = vmatpush1.msra.mxu0 %v1024
    %1036 = vmatprep.subr.mxu0 0.0
    %1037 = vmatpush1.msra.mxu0 0.0
    %1038 = vmatprep.subr.mxu0 0.0
    %1039 = vmatpush1.msra.mxu0 0.0
    %1040 = vmatprep.subr.mxu0 0.0
    %1041 = vmatpush1.msra.mxu0 0.0
    %1042 = vmatprep.subr.mxu0 0.0
    %1043 = vmatpush1.msra.mxu0 0.0
    %1044 = vmatprep.subr.mxu0 0.0
    %1045 = vmatpush1.msra.mxu0 0.0
    %1046 = vmatprep.subr.mxu0 0.0
    %1047 = vmatpush1.msra.mxu0 0.0
    %1048 = vmatprep.subr.mxu0 0.0
    %1049 = vmatpush1.msra.mxu0 0.0
    %1050 = vmatprep.subr.mxu0 0.0
    %1051 = vmatpush1.msra.mxu0 0.0
    %1052 = vmatprep.subr.mxu0 0.0
    %1053 = vmatpush1.msra.mxu0 0.0
    %1054 = vmatprep.subr.mxu0 0.0
    %1055 = vmatpush1.msra.mxu0 0.0
    %1056 = vmatprep.subr.mxu0 0.0
    %1057 = vmatpush1.msra.mxu0 0.0
    %1058 = vmatprep.subr.mxu0 0.0
    %1059 = vmatpush1.msra.mxu0 0.0
    %1060 = vmatprep.subr.mxu0 0.0
    %1061 = vmatpush1.msra.mxu0 0.0
    %1062 = vmatprep.subr.mxu0 0.0
    %1063 = vmatpush1.msra.mxu0 0.0
    %1064 = vmatprep.subr.mxu0 0.0
    %1065 = vmatpush1.msra.mxu0 0.0
    %1066 = vmatprep.subr.mxu0 0.0
    %1067 = vmatpush1.msra.mxu0 0.0
    %1068 = vmatprep.subr.mxu0 0.0
    %1069 = vmatpush1.msra.mxu0 0.0
    %1070 = vmatprep.subr.mxu0 0.0
    %1071 = vmatpush1.msra.mxu0 0.0
    %1072 = vmatprep.subr.mxu0 0.0
    %1073 = vmatpush1.msra.mxu0 0.0
    %1074 = vmatprep.subr.mxu0 0.0
    %1075 = vmatpush1.msra.mxu0 0.0
    %1076 = vmatprep.subr.mxu0 0.0
    %1077 = vmatpush1.msra.mxu0 0.0
    %1078 = vmatprep.subr.mxu0 0.0
    %1079 = vmatpush1.msra.mxu0 0.0
    %1080 = vmatprep.subr.mxu0 0.0
    %1081 = vmatpush1.msra.mxu0 0.0
    %1082 = vmatprep.subr.mxu0 0.0
    %1083 = vmatpush1.msra.mxu0 0.0
    %1084 = vmatprep.subr.mxu0 0.0
    %1085 = vmatpush1.msra.mxu0 0.0
    %1086 = vmatprep.subr.mxu0 0.0
    %1087 = vmatpush1.msra.mxu0 0.0
    %1088 = vmatprep.subr.mxu0 0.0
    %1089 = vmatpush1.msra.mxu0 0.0
    %1090 = vmatprep.mubr.f32.mxu0 0.0
    %1091 = vmatmul.mubr.f32.gmra.mrb[0].mxu0 %v975
    %v1092 = vpop.f32.mrb[0].mxu0
    %v1093 = vadd.f32 %v971, %v1092
    %v1094 = vpop.f32.mrb[0].mxu0
    %1095 = vmatprep.mubr.f32.mxu0 0.0
    %1096 = vmatmul.mubr.f32.gmra.mrb[0].mxu0 %v978
    %v1097 = vpop.f32.mrb[0].mxu0
    %v1098 = vadd.f32 %v971, %v1097
    %v1099 = vpop.f32.mrb[0].mxu0
    %1100 = vmatprep.mubr.f32.mxu0 0.0
    %1101 = vmatmul.mubr.f32.gmra.mrb[0].mxu0 %v981
    %v1102 = vpop.f32.mrb[0].mxu0
    %v1103 = vadd.f32 %v971, %v1102
    %v1104 = vpop.f32.mrb[0].mxu0
    %1105 = vmatprep.mubr.f32.mxu0 0.0
    %1106 = vmatmul.mubr.f32.gmra.mrb[0].mxu0 %v984
    %v1107 = vpop.f32.mrb[0].mxu0
    %v1108 = vadd.f32 %v971, %v1107
    %v1109 = vpop.f32.mrb[0].mxu0
    %1110 = vmatprep.mubr.f32.mxu0 0.0
    %1111 = vmatmul.mubr.f32.gmra.mrb[0].mxu0 %v987
    %v1112 = vpop.f32.mrb[0].mxu0
    %v1113 = vadd.f32 %v971, %v1112
    %v1114 = vpop.f32.mrb[0].mxu0
    %1115 = vmatprep.mubr.f32.mxu0 0.0
    %1116 = vmatmul.mubr.f32.gmra.mrb[0].mxu0 %v990
    %v1117 = vpop.f32.mrb[0].mxu0
    %v1118 = vadd.f32 %v971, %v1117
    %v1119 = vpop.f32.mrb[0].mxu0
    %1120 = vmatprep.mubr.f32.mxu0 0.0
    %1121 = vmatmul.mubr.f32.gmra.mrb[0].mxu0 %v993
    %v1122 = vpop.f32.mrb[0].mxu0
    %v1123 = vadd.f32 %v971, %v1122
    %v1124 = vpop.f32.mrb[0].mxu0
    %1125 = vmatprep.mubr.f32.mxu0 0.0
    %1126 = vmatmul.mubr.f32.gmra.mrb[0].mxu0 %v996
    %v1127 = vpop.f32.mrb[0].mxu0
    %v1128 = vadd.f32 %v971, %v1127
    %v1129 = vpop.f32.mrb[0].mxu0
    %1130 = vmatprep.mubr.f32.mxu0 0.0
    %1131 = vmatmul.mubr.f32.gmra.mrb[0].mxu0 %v999
    %v1132 = vpop.f32.mrb[0].mxu0
    %v1133 = vadd.f32 %v971, %v1132
    %v1134 = vpop.f32.mrb[0].mxu0
    %1135 = vmatprep.mubr.f32.mxu0 0.0
    %1136 = vmatmul.mubr.f32.gmra.mrb[0].mxu0 %v1002
    %v1137 = vpop.f32.mrb[0].mxu0
    %v1138 = vadd.f32 %v971, %v1137
    %v1139 = vpop.f32.mrb[0].mxu0
    %1140 = vmatprep.mubr.f32.mxu0 0.0
    %1141 = vmatmul.mubr.f32.gmra.mrb[0].mxu0 %v1005
    %v1142 = vpop.f32.mrb[0].mxu0
    %v1143 = vadd.f32 %v971, %v1142
    %v1144 = vpop.f32.mrb[0].mxu0
    %1145 = vmatprep.mubr.f32.mxu0 0.0
    %1146 = vmatmul.mubr.f32.gmra.mrb[0].mxu0 %v1008
    %v1147 = vpop.f32.mrb[0].mxu0
    %v1148 = vadd.f32 %v971, %v1147
    %v1149 = vpop.f32.mrb[0].mxu0
    %1150 = vmatprep.mubr.f32.mxu0 0.0
    %1151 = vmatmul.mubr.f32.gmra.mrb[0].mxu0 %v1011
    %v1152 = vpop.f32.mrb[0].mxu0
    %v1153 = vadd.f32 %v971, %v1152
    %v1154 = vpop.f32.mrb[0].mxu0
    %1155 = vmatprep.mubr.f32.mxu0 0.0
    %1156 = vmatmul.mubr.f32.gmra.mrb[0].mxu0 %v1014
    %v1157 = vpop.f32.mrb[0].mxu0
    %v1158 = vadd.f32 %v971, %v1157
    %v1159 = vpop.f32.mrb[0].mxu0
    %1160 = vmatprep.mubr.f32.mxu0 0.0
    %1161 = vmatmul.mubr.f32.gmra.mrb[0].mxu0 %v1017
    %v1162 = vpop.f32.mrb[0].mxu0
    %v1163 = vadd.f32 %v971, %v1162
    %v1164 = vpop.f32.mrb[0].mxu0
    %1165 = vmatprep.mubr.f32.mxu0 0.0
    %1166 = vmatmul.mubr.f32.gmra.mrb[0].mxu0 %v1020
    %v1167 = vpop.f32.mrb[0].mxu0
    %v1168 = vadd.f32 %v971, %v1167
    %v1169 = vpop.f32.mrb[0].mxu0
    %1170 = vdwg.mxu0
    %v1171 = vmax.f32 %v1093, 0.0
    %v1172 = vmax.f32 %v1098, 0.0
    %v1173 = vmax.f32 %v1103, 0.0
    %v1174 = vmax.f32 %v1108, 0.0
    %v1175 = vmax.f32 %v1113, 0.0
    %v1176 = vmax.f32 %v1118, 0.0
    %v1177 = vmax.f32 %v1123, 0.0
    %v1178 = vmax.f32 %v1128, 0.0
    %v1179 = vmax.f32 %v1133, 0.0
    %v1180 = vmax.f32 %v1138, 0.0
    %v1181 = vmax.f32 %v1143, 0.0
    %v1182 = vmax.f32 %v1148, 0.0
    %v1183 = vmax.f32 %v1153, 0.0
    %v1184 = vmax.f32 %v1158, 0.0
    %v1185 = vmax.f32 %v1163, 0.0
    %v1186 = vmax.f32 %v1168, 0.0
    %v1187 = vrot.slane %v1171, 7
    %v1188 = vrot.slane %v1172, 7
    %v1189 = vrot.slane %v1173, 7
    %v1190 = vrot.slane %v1174, 7
    %v1191 = vrot.slane %v1175, 7
    %v1192 = vrot.slane %v1176, 7
    %v1193 = vrot.slane %v1177, 7
    %v1194 = vrot.slane %v1178, 7
    %v1195 = vrot.slane %v1179, 7
    %v1196 = vrot.slane %v1180, 7
    %v1197 = vrot.slane %v1181, 7
    %v1198 = vrot.slane %v1182, 7
    %v1199 = vrot.slane %v1183, 7
    %v1200 = vrot.slane %v1184, 7
    %v1201 = vrot.slane %v1185, 7
    %v1202 = vrot.slane %v1186, 7
    %v1203 = vsel %vm234, %v1187, 0.0
    %v1204 = vsel %vm234, %v1188, 0.0
    %v1205 = vsel %vm234, %v1189, 0.0
    %v1206 = vsel %vm234, %v1190, 0.0
    %v1207 = vsel %vm234, %v1191, 0.0
    %v1208 = vsel %vm234, %v1192, 0.0
    %v1209 = vsel %vm234, %v1193, 0.0
    %v1210 = vsel %vm234, %v1194, 0.0
    %v1211 = vsel %vm234, %v1195, 0.0
    %v1212 = vsel %vm234, %v1196, 0.0
    %v1213 = vsel %vm234, %v1197, 0.0
    %v1214 = vsel %vm234, %v1198, 0.0
    %v1215 = vsel %vm234, %v1199, 0.0
    %v1216 = vsel %vm234, %v1200, 0.0
    %v1217 = vsel %vm234, %v1201, 0.0
    %v1218 = vsel %vm234, %v1202, 0.0
    %v1219 = vrot.slane %v1171, 1
    %v1220 = vrot.slane %v1172, 1
    %v1221 = vrot.slane %v1173, 1
    %v1222 = vrot.slane %v1174, 1
    %v1223 = vrot.slane %v1175, 1
    %v1224 = vrot.slane %v1176, 1
    %v1225 = vrot.slane %v1177, 1
    %v1226 = vrot.slane %v1178, 1
    %v1227 = vrot.slane %v1179, 1
    %v1228 = vrot.slane %v1180, 1
    %v1229 = vrot.slane %v1181, 1
    %v1230 = vrot.slane %v1182, 1
    %v1231 = vrot.slane %v1183, 1
    %v1232 = vrot.slane %v1184, 1
    %v1233 = vrot.slane %v1185, 1
    %v1234 = vrot.slane %v1186, 1
    %v1235 = vsel %vm270, %v1219, 0.0
    %v1236 = vsel %vm270, %v1220, 0.0
    %v1237 = vsel %vm270, %v1221, 0.0
    %v1238 = vsel %vm270, %v1222, 0.0
    %v1239 = vsel %vm270, %v1223, 0.0
    %v1240 = vsel %vm270, %v1224, 0.0
    %v1241 = vsel %vm270, %v1225, 0.0
    %v1242 = vsel %vm270, %v1226, 0.0
    %v1243 = vsel %vm270, %v1227, 0.0
    %v1244 = vsel %vm270, %v1228, 0.0
    %v1245 = vsel %vm270, %v1229, 0.0
    %v1246 = vsel %vm270, %v1230, 0.0
    %v1247 = vsel %vm270, %v1231, 0.0
    %v1248 = vsel %vm270, %v1232, 0.0
    %v1249 = vsel %vm270, %v1233, 0.0
    %v1250 = vsel %vm270, %v1234, 0.0
    %v1251 = vsel 0, 0.0, %v1203
    %v1252 = vsel 0, 0.0, %v1204
    %v1253 = vsel 0, 0.0, %v1205
    %v1254 = vsel 0, 0.0, %v1206
    %v1255 = vsel 0, 0.0, %v1207
    %v1256 = vsel 0, 0.0, %v1208
    %v1257 = vsel 0, 0.0, %v1209
    %v1258 = vsel 1, 0.0, %v1210
    %v1259 = vsel 0, 0.0, %v1211
    %v1260 = vsel 0, 0.0, %v1212
    %v1261 = vsel 0, 0.0, %v1213
    %v1262 = vsel 0, 0.0, %v1214
    %v1263 = vsel 0, 0.0, %v1215
    %v1264 = vsel 0, 0.0, %v1216
    %v1265 = vsel 0, 0.0, %v1217
    %v1266 = vsel 0, 0.0, %v1171
    %v1267 = vsel 0, 0.0, %v1172
    %v1268 = vsel 0, 0.0, %v1173
    %v1269 = vsel 0, 0.0, %v1174
    %v1270 = vsel 0, 0.0, %v1175
    %v1271 = vsel 0, 0.0, %v1176
    %v1272 = vsel 0, 0.0, %v1177
    %v1273 = vsel 1, 0.0, %v1178
    %v1274 = vsel 0, 0.0, %v1179
    %v1275 = vsel 0, 0.0, %v1180
    %v1276 = vsel 0, 0.0, %v1181
    %v1277 = vsel 0, 0.0, %v1182
    %v1278 = vsel 0, 0.0, %v1183
    %v1279 = vsel 0, 0.0, %v1184
    %v1280 = vsel 0, 0.0, %v1185
    %v1281 = vsel 0, 0.0, %v1235
    %v1282 = vsel 0, 0.0, %v1236
    %v1283 = vsel 0, 0.0, %v1237
    %v1284 = vsel 0, 0.0, %v1238
    %v1285 = vsel 0, 0.0, %v1239
    %v1286 = vsel 0, 0.0, %v1240
    %v1287 = vsel 0, 0.0, %v1241
    %v1288 = vsel 1, 0.0, %v1242
    %v1289 = vsel 0, 0.0, %v1243
    %v1290 = vsel 0, 0.0, %v1244
    %v1291 = vsel 0, 0.0, %v1245
    %v1292 = vsel 0, 0.0, %v1246
    %v1293 = vsel 0, 0.0, %v1247
    %v1294 = vsel 0, 0.0, %v1248
    %v1295 = vsel 0, 0.0, %v1249
    %v1296 = vsel 0, 0.0, %v1210
    %v1297 = vsel 1, 0.0, %v1211
    %v1298 = vsel 0, 0.0, %v1218
    %v1299 = vsel 0, 0.0, %v1178
    %v1300 = vsel 1, 0.0, %v1179
    %v1301 = vsel 0, 0.0, %v1186
    %v1302 = vsel 0, 0.0, %v1242
    %v1303 = vsel 1, 0.0, %v1243
    %v1304 = vsel 0, 0.0, %v1250
    %1320 = vrot.lane.b32.xlu0 %v1266, 8
    %v1321 = vpop.permute.xlu0 %1320
    %1322 = vrot.lane.b32.xlu0 %v1267, 8
    %v1323 = vpop.permute.xlu0 %1322
    %1324 = vrot.lane.b32.xlu0 %v1268, 8
    %v1325 = vpop.permute.xlu0 %1324
    %1326 = vrot.lane.b32.xlu0 %v1269, 8
    %v1327 = vpop.permute.xlu0 %1326
    %1328 = vrot.lane.b32.xlu0 %v1270, 8
    %v1329 = vpop.permute.xlu0 %1328
    %1330 = vrot.lane.b32.xlu0 %v1271, 8
    %v1331 = vpop.permute.xlu0 %1330
    %1332 = vrot.lane.b32.xlu0 %v1272, 8
    %v1333 = vpop.permute.xlu0 %1332
    %1334 = vrot.lane.b32.xlu0 %v1273, 8
    %v1335 = vpop.permute.xlu0 %1334
    %1336 = vrot.lane.b32.xlu0 %v1274, 8
    %v1337 = vpop.permute.xlu0 %1336
    %1338 = vrot.lane.b32.xlu0 %v1275, 8
    %v1339 = vpop.permute.xlu0 %1338
    %1340 = vrot.lane.b32.xlu0 %v1276, 8
    %v1341 = vpop.permute.xlu0 %1340
    %1342 = vrot.lane.b32.xlu0 %v1277, 8
    %v1343 = vpop.permute.xlu0 %1342
    %1344 = vrot.lane.b32.xlu0 %v1278, 8
    %v1345 = vpop.permute.xlu0 %1344
    %1346 = vrot.lane.b32.xlu0 %v1279, 8
    %v1347 = vpop.permute.xlu0 %1346
    %1348 = vrot.lane.b32.xlu0 %v1280, 8
    %v1349 = vpop.permute.xlu0 %1348
    %1380 = vrot.lane.b32.xlu0 0.0, 16
    %v1381 = vpop.permute.xlu0 %1380
    %1382 = vrot.lane.b32.xlu0 %v1281, 16
    %v1383 = vpop.permute.xlu0 %1382
    %1384 = vrot.lane.b32.xlu0 %v1282, 16
    %v1385 = vpop.permute.xlu0 %1384
    %1386 = vrot.lane.b32.xlu0 %v1283, 16
    %v1387 = vpop.permute.xlu0 %1386
    %1388 = vrot.lane.b32.xlu0 %v1284, 16
    %v1389 = vpop.permute.xlu0 %1388
    %1390 = vrot.lane.b32.xlu0 %v1285, 16
    %v1391 = vpop.permute.xlu0 %1390
    %1392 = vrot.lane.b32.xlu0 %v1286, 16
    %v1393 = vpop.permute.xlu0 %1392
    %1394 = vrot.lane.b32.xlu0 %v1287, 16
    %v1395 = vpop.permute.xlu0 %1394
    %1396 = vrot.lane.b32.xlu0 %v1288, 16
    %v1397 = vpop.permute.xlu0 %1396
    %1398 = vrot.lane.b32.xlu0 %v1289, 16
    %v1399 = vpop.permute.xlu0 %1398
    %1400 = vrot.lane.b32.xlu0 %v1290, 16
    %v1401 = vpop.permute.xlu0 %1400
    %1402 = vrot.lane.b32.xlu0 %v1291, 16
    %v1403 = vpop.permute.xlu0 %1402
    %1404 = vrot.lane.b32.xlu0 %v1292, 16
    %v1405 = vpop.permute.xlu0 %1404
    %1406 = vrot.lane.b32.xlu0 %v1293, 16
    %v1407 = vpop.permute.xlu0 %1406
    %1408 = vrot.lane.b32.xlu0 %v1294, 16
    %v1409 = vpop.permute.xlu0 %1408
    %1410 = vrot.lane.b32.xlu0 %v1295, 16
    %v1411 = vpop.permute.xlu0 %1410
    %1444 = vrot.lane.b32.xlu0 %v1203, 24
    %v1445 = vpop.permute.xlu0 %1444
    %1446 = vrot.lane.b32.xlu0 %v1204, 24
    %v1447 = vpop.permute.xlu0 %1446
    %1448 = vrot.lane.b32.xlu0 %v1205, 24
    %v1449 = vpop.permute.xlu0 %1448
    %1450 = vrot.lane.b32.xlu0 %v1206, 24
    %v1451 = vpop.permute.xlu0 %1450
    %1452 = vrot.lane.b32.xlu0 %v1207, 24
    %v1453 = vpop.permute.xlu0 %1452
    %1454 = vrot.lane.b32.xlu0 %v1208, 24
    %v1455 = vpop.permute.xlu0 %1454
    %1456 = vrot.lane.b32.xlu0 %v1209, 24
    %v1457 = vpop.permute.xlu0 %1456
    %1458 = vrot.lane.b32.xlu0 %v1210, 24
    %v1459 = vpop.permute.xlu0 %1458
    %1460 = vrot.lane.b32.xlu0 %v1211, 24
    %v1461 = vpop.permute.xlu0 %1460
    %1462 = vrot.lane.b32.xlu0 %v1212, 24
    %v1463 = vpop.permute.xlu0 %1462
    %1464 = vrot.lane.b32.xlu0 %v1213, 24
    %v1465 = vpop.permute.xlu0 %1464
    %1466 = vrot.lane.b32.xlu0 %v1214, 24
    %v1467 = vpop.permute.xlu0 %1466
    %1468 = vrot.lane.b32.xlu0 %v1215, 24
    %v1469 = vpop.permute.xlu0 %1468
    %1470 = vrot.lane.b32.xlu0 %v1216, 24
    %v1471 = vpop.permute.xlu0 %1470
    %1472 = vrot.lane.b32.xlu0 %v1217, 24
    %v1473 = vpop.permute.xlu0 %1472
    %1474 = vrot.lane.b32.xlu0 %v1218, 24
    %v1475 = vpop.permute.xlu0 %1474
    %1508 = vrot.lane.b32.xlu0 %v1171, 32
    %v1509 = vpop.permute.xlu0 %1508
    %1510 = vrot.lane.b32.xlu0 %v1172, 32
    %v1511 = vpop.permute.xlu0 %1510
    %1512 = vrot.lane.b32.xlu0 %v1173, 32
    %v1513 = vpop.permute.xlu0 %1512
    %1514 = vrot.lane.b32.xlu0 %v1174, 32
    %v1515 = vpop.permute.xlu0 %1514
    %1516 = vrot.lane.b32.xlu0 %v1175, 32
    %v1517 = vpop.permute.xlu0 %1516
    %1518 = vrot.lane.b32.xlu0 %v1176, 32
    %v1519 = vpop.permute.xlu0 %1518
    %1520 = vrot.lane.b32.xlu0 %v1177, 32
    %v1521 = vpop.permute.xlu0 %1520
    %1522 = vrot.lane.b32.xlu0 %v1178, 32
    %v1523 = vpop.permute.xlu0 %1522
    %1524 = vrot.lane.b32.xlu0 %v1179, 32
    %v1525 = vpop.permute.xlu0 %1524
    %1526 = vrot.lane.b32.xlu0 %v1180, 32
    %v1527 = vpop.permute.xlu0 %1526
    %1528 = vrot.lane.b32.xlu0 %v1181, 32
    %v1529 = vpop.permute.xlu0 %1528
    %1530 = vrot.lane.b32.xlu0 %v1182, 32
    %v1531 = vpop.permute.xlu0 %1530
    %1532 = vrot.lane.b32.xlu0 %v1183, 32
    %v1533 = vpop.permute.xlu0 %1532
    %1534 = vrot.lane.b32.xlu0 %v1184, 32
    %v1535 = vpop.permute.xlu0 %1534
    %1536 = vrot.lane.b32.xlu0 %v1185, 32
    %v1537 = vpop.permute.xlu0 %1536
    %1538 = vrot.lane.b32.xlu0 %v1186, 32
    %v1539 = vpop.permute.xlu0 %1538
    %1572 = vrot.lane.b32.xlu0 %v1235, 40
    %v1573 = vpop.permute.xlu0 %1572
    %1574 = vrot.lane.b32.xlu0 %v1236, 40
    %v1575 = vpop.permute.xlu0 %1574
    %1576 = vrot.lane.b32.xlu0 %v1237, 40
    %v1577 = vpop.permute.xlu0 %1576
    %1578 = vrot.lane.b32.xlu0 %v1238, 40
    %v1579 = vpop.permute.xlu0 %1578
    %1580 = vrot.lane.b32.xlu0 %v1239, 40
    %v1581 = vpop.permute.xlu0 %1580
    %1582 = vrot.lane.b32.xlu0 %v1240, 40
    %v1583 = vpop.permute.xlu0 %1582
    %1584 = vrot.lane.b32.xlu0 %v1241, 40
    %v1585 = vpop.permute.xlu0 %1584
    %1586 = vrot.lane.b32.xlu0 %v1242, 40
    %v1587 = vpop.permute.xlu0 %1586
    %1588 = vrot.lane.b32.xlu0 %v1243, 40
    %v1589 = vpop.permute.xlu0 %1588
    %1590 = vrot.lane.b32.xlu0 %v1244, 40
    %v1591 = vpop.permute.xlu0 %1590
    %1592 = vrot.lane.b32.xlu0 %v1245, 40
    %v1593 = vpop.permute.xlu0 %1592
    %1594 = vrot.lane.b32.xlu0 %v1246, 40
    %v1595 = vpop.permute.xlu0 %1594
    %1596 = vrot.lane.b32.xlu0 %v1247, 40
    %v1597 = vpop.permute.xlu0 %1596
    %1598 = vrot.lane.b32.xlu0 %v1248, 40
    %v1599 = vpop.permute.xlu0 %1598
    %1600 = vrot.lane.b32.xlu0 %v1249, 40
    %v1601 = vpop.permute.xlu0 %1600
    %1602 = vrot.lane.b32.xlu0 %v1250, 40
    %v1603 = vpop.permute.xlu0 %1602
    %1635 = vrot.lane.b32.xlu0 %v1252, 48
    %v1636 = vpop.permute.xlu0 %1635
    %1637 = vrot.lane.b32.xlu0 %v1253, 48
    %v1638 = vpop.permute.xlu0 %1637
    %1639 = vrot.lane.b32.xlu0 %v1254, 48
    %v1640 = vpop.permute.xlu0 %1639
    %1641 = vrot.lane.b32.xlu0 %v1255, 48
    %v1642 = vpop.permute.xlu0 %1641
    %1643 = vrot.lane.b32.xlu0 %v1256, 48
    %v1644 = vpop.permute.xlu0 %1643
    %1645 = vrot.lane.b32.xlu0 %v1257, 48
    %v1646 = vpop.permute.xlu0 %1645
    %1647 = vrot.lane.b32.xlu0 %v1296, 48
    %v1648 = vpop.permute.xlu0 %1647
    %1649 = vrot.lane.b32.xlu0 %v1297, 48
    %v1650 = vpop.permute.xlu0 %1649
    %1651 = vrot.lane.b32.xlu0 %v1260, 48
    %v1652 = vpop.permute.xlu0 %1651
    %1653 = vrot.lane.b32.xlu0 %v1261, 48
    %v1654 = vpop.permute.xlu0 %1653
    %1655 = vrot.lane.b32.xlu0 %v1262, 48
    %v1656 = vpop.permute.xlu0 %1655
    %1657 = vrot.lane.b32.xlu0 %v1263, 48
    %v1658 = vpop.permute.xlu0 %1657
    %1659 = vrot.lane.b32.xlu0 %v1264, 48
    %v1660 = vpop.permute.xlu0 %1659
    %1661 = vrot.lane.b32.xlu0 %v1265, 48
    %v1662 = vpop.permute.xlu0 %1661
    %1663 = vrot.lane.b32.xlu0 %v1298, 48
    %v1664 = vpop.permute.xlu0 %1663
    %1665 = vrot.lane.b32.xlu0 0.0, 48
    %v1666 = vpop.permute.xlu0 %1665
    %1686 = vrot.lane.b32.xlu0 %v1267, 56
    %v1687 = vpop.permute.xlu0 %1686
    %1688 = vrot.lane.b32.xlu0 %v1268, 56
    %v1689 = vpop.permute.xlu0 %1688
    %1690 = vrot.lane.b32.xlu0 %v1269, 56
    %v1691 = vpop.permute.xlu0 %1690
    %1692 = vrot.lane.b32.xlu0 %v1270, 56
    %v1693 = vpop.permute.xlu0 %1692
    %1694 = vrot.lane.b32.xlu0 %v1271, 56
    %v1695 = vpop.permute.xlu0 %1694
    %1696 = vrot.lane.b32.xlu0 %v1272, 56
    %v1697 = vpop.permute.xlu0 %1696
    %1698 = vrot.lane.b32.xlu0 %v1299, 56
    %v1699 = vpop.permute.xlu0 %1698
    %1700 = vrot.lane.b32.xlu0 %v1300, 56
    %v1701 = vpop.permute.xlu0 %1700
    %1702 = vrot.lane.b32.xlu0 %v1275, 56
    %v1703 = vpop.permute.xlu0 %1702
    %1704 = vrot.lane.b32.xlu0 %v1276, 56
    %v1705 = vpop.permute.xlu0 %1704
    %1706 = vrot.lane.b32.xlu0 %v1277, 56
    %v1707 = vpop.permute.xlu0 %1706
    %1708 = vrot.lane.b32.xlu0 %v1278, 56
    %v1709 = vpop.permute.xlu0 %1708
    %1710 = vrot.lane.b32.xlu0 %v1279, 56
    %v1711 = vpop.permute.xlu0 %1710
    %1712 = vrot.lane.b32.xlu0 %v1280, 56
    %v1713 = vpop.permute.xlu0 %1712
    %1714 = vrot.lane.b32.xlu0 %v1301, 56
    %v1715 = vpop.permute.xlu0 %1714
    %1716 = vrot.lane.b32.xlu0 0.0, 56
    %v1717 = vpop.permute.xlu0 %1716
    %1737 = vrot.lane.b32.xlu0 %v1282, 64
    %v1738 = vpop.permute.xlu0 %1737
    %1739 = vrot.lane.b32.xlu0 %v1283, 64
    %v1740 = vpop.permute.xlu0 %1739
    %1741 = vrot.lane.b32.xlu0 %v1284, 64
    %v1742 = vpop.permute.xlu0 %1741
    %1743 = vrot.lane.b32.xlu0 %v1285, 64
    %v1744 = vpop.permute.xlu0 %1743
    %1745 = vrot.lane.b32.xlu0 %v1286, 64
    %v1746 = vpop.permute.xlu0 %1745
    %1747 = vrot.lane.b32.xlu0 %v1287, 64
    %v1748 = vpop.permute.xlu0 %1747
    %1749 = vrot.lane.b32.xlu0 %v1302, 64
    %v1750 = vpop.permute.xlu0 %1749
    %1751 = vrot.lane.b32.xlu0 %v1303, 64
    %v1752 = vpop.permute.xlu0 %1751
    %1753 = vrot.lane.b32.xlu0 %v1290, 64
    %v1754 = vpop.permute.xlu0 %1753
    %1755 = vrot.lane.b32.xlu0 %v1291, 64
    %v1756 = vpop.permute.xlu0 %1755
    %1757 = vrot.lane.b32.xlu0 %v1292, 64
    %v1758 = vpop.permute.xlu0 %1757
    %1759 = vrot.lane.b32.xlu0 %v1293, 64
    %v1760 = vpop.permute.xlu0 %1759
    %1761 = vrot.lane.b32.xlu0 %v1294, 64
    %v1762 = vpop.permute.xlu0 %1761
    %1763 = vrot.lane.b32.xlu0 %v1295, 64
    %v1764 = vpop.permute.xlu0 %1763
    %1765 = vrot.lane.b32.xlu0 %v1304, 64
    %v1766 = vpop.permute.xlu0 %1765
    %1767 = vrot.lane.b32.xlu0 0.0, 64
    %v1768 = vpop.permute.xlu0 %1767
    %v1785 = vsel %vm842, 0.0, %v421
    %v1786 = vsel %vm842, %v1251, %v1321
    %v1787 = vsel %vm842, %v1252, %v1323
    %v1788 = vsel %vm842, %v1253, %v1325
    %v1789 = vsel %vm842, %v1254, %v1327
    %v1790 = vsel %vm842, %v1255, %v1329
    %v1791 = vsel %vm842, %v1256, %v1331
    %v1792 = vsel %vm842, %v1257, %v1333
    %v1793 = vsel %vm842, %v1258, %v1335
    %v1794 = vsel %vm842, %v1259, %v1337
    %v1795 = vsel %vm842, %v1260, %v1339
    %v1796 = vsel %vm842, %v1261, %v1341
    %v1797 = vsel %vm842, %v1262, %v1343
    %v1798 = vsel %vm842, %v1263, %v1345
    %v1799 = vsel %vm842, %v1264, %v1347
    %v1800 = vsel %vm842, %v1265, %v1349
    %v1801 = vsel %vm876, %v1785, %v1381
    %v1802 = vsel %vm876, %v1786, %v1383
    %v1803 = vsel %vm876, %v1787, %v1385
    %v1804 = vsel %vm876, %v1788, %v1387
    %v1805 = vsel %vm876, %v1789, %v1389
    %v1806 = vsel %vm876, %v1790, %v1391
    %v1807 = vsel %vm876, %v1791, %v1393
    %v1808 = vsel %vm876, %v1792, %v1395
    %v1809 = vsel %vm876, %v1793, %v1397
    %v1810 = vsel %vm876, %v1794, %v1399
    %v1811 = vsel %vm876, %v1795, %v1401
    %v1812 = vsel %vm876, %v1796, %v1403
    %v1813 = vsel %vm876, %v1797, %v1405
    %v1814 = vsel %vm876, %v1798, %v1407
    %v1815 = vsel %vm876, %v1799, %v1409
    %v1816 = vsel %vm876, %v1800, %v1411
    %v1817 = vsel %vm910, %v1801, %v1445
    %v1818 = vsel %vm910, %v1802, %v1447
    %v1819 = vsel %vm910, %v1803, %v1449
    %v1820 = vsel %vm910, %v1804, %v1451
    %v1821 = vsel %vm910, %v1805, %v1453
    %v1822 = vsel %vm910, %v1806, %v1455
    %v1823 = vsel %vm910, %v1807, %v1457
    %v1824 = vsel %vm910, %v1808, %v1459
    %v1825 = vsel %vm910, %v1809, %v1461
    %v1826 = vsel %vm910, %v1810, %v1463
    %v1827 = vsel %vm910, %v1811, %v1465
    %v1828 = vsel %vm910, %v1812, %v1467
    %v1829 = vsel %vm910, %v1813, %v1469
    %v1830 = vsel %vm910, %v1814, %v1471
    %v1831 = vsel %vm910, %v1815, %v1473
    %v1832 = vsel %vm910, %v1816, %v1475
    %v1833 = vsel %vm944, %v1817, %v1509
    %v1834 = vsel %vm944, %v1818, %v1511
    %v1835 = vsel %vm944, %v1819, %v1513
    %v1836 = vsel %vm944, %v1820, %v1515
    %v1837 = vsel %vm944, %v1821, %v1517
    %v1838 = vsel %vm944, %v1822, %v1519
    %v1839 = vsel %vm944, %v1823, %v1521
    %v1840 = vsel %vm944, %v1824, %v1523
    %v1841 = vsel %vm944, %v1825, %v1525
    %v1842 = vsel %vm944, %v1826, %v1527
    %v1843 = vsel %vm944, %v1827, %v1529
    %v1844 = vsel %vm944, %v1828, %v1531
    %v1845 = vsel %vm944, %v1829, %v1533
    %v1846 = vsel %vm944, %v1830, %v1535
    %v1847 = vsel %vm944, %v1831, %v1537
    %v1848 = vsel %vm944, %v1832, %v1539
    %vm1849 = vcmask 326656
    %v1850 = vsel %vm1849, %v1833, %v1573
    %v1851 = vsel %vm1849, %v1834, %v1575
    %v1852 = vsel %vm1849, %v1835, %v1577
    %v1853 = vsel %vm1849, %v1836, %v1579
    %v1854 = vsel %vm1849, %v1837, %v1581
    %v1855 = vsel %vm1849, %v1838, %v1583
    %v1856 = vsel %vm1849, %v1839, %v1585
    %v1857 = vsel %vm1849, %v1840, %v1587
    %v1858 = vsel %vm1849, %v1841, %v1589
    %v1859 = vsel %vm1849, %v1842, %v1591
    %v1860 = vsel %vm1849, %v1843, %v1593
    %v1861 = vsel %vm1849, %v1844, %v1595
    %v1862 = vsel %vm1849, %v1845, %v1597
    %v1863 = vsel %vm1849, %v1846, %v1599
    %v1864 = vsel %vm1849, %v1847, %v1601
    %v1865 = vsel %vm1849, %v1848, %v1603
    %vm1866 = vcmask 392192
    %v1867 = vsel %vm1866, %v1850, %v1636
    %v1868 = vsel %vm1866, %v1851, %v1638
    %v1869 = vsel %vm1866, %v1852, %v1640
    %v1870 = vsel %vm1866, %v1853, %v1642
    %v1871 = vsel %vm1866, %v1854, %v1644
    %v1872 = vsel %vm1866, %v1855, %v1646
    %v1873 = vsel %vm1866, %v1856, %v1648
    %v1874 = vsel %vm1866, %v1857, %v1650
    %v1875 = vsel %vm1866, %v1858, %v1652
    %v1876 = vsel %vm1866, %v1859, %v1654
    %v1877 = vsel %vm1866, %v1860, %v1656
    %v1878 = vsel %vm1866, %v1861, %v1658
    %v1879 = vsel %vm1866, %v1862, %v1660
    %v1880 = vsel %vm1866, %v1863, %v1662
    %v1881 = vsel %vm1866, %v1864, %v1664
    %v1882 = vsel %vm1866, %v1865, %v1666
    %vm1883 = vcmask 457728
    %v1884 = vsel %vm1883, %v1867, %v1687
    %v1885 = vsel %vm1883, %v1868, %v1689
    %v1886 = vsel %vm1883, %v1869, %v1691
    %v1887 = vsel %vm1883, %v1870, %v1693
    %v1888 = vsel %vm1883, %v1871, %v1695
    %v1889 = vsel %vm1883, %v1872, %v1697
    %v1890 = vsel %vm1883, %v1873, %v1699
    %v1891 = vsel %vm1883, %v1874, %v1701
    %v1892 = vsel %vm1883, %v1875, %v1703
    %v1893 = vsel %vm1883, %v1876, %v1705
    %v1894 = vsel %vm1883, %v1877, %v1707
    %v1895 = vsel %vm1883, %v1878, %v1709
    %v1896 = vsel %vm1883, %v1879, %v1711
    %v1897 = vsel %vm1883, %v1880, %v1713
    %v1898 = vsel %vm1883, %v1881, %v1715
    %v1899 = vsel %vm1883, %v1882, %v1717
    %vm1900 = vcmask 523264
    %v1901 = vsel %vm1900, %v1884, %v1738
    %v1902 = vsel %vm1900, %v1885, %v1740
    %v1903 = vsel %vm1900, %v1886, %v1742
    %v1904 = vsel %vm1900, %v1887, %v1744
    %v1905 = vsel %vm1900, %v1888, %v1746
    %v1906 = vsel %vm1900, %v1889, %v1748
    %v1907 = vsel %vm1900, %v1890, %v1750
    %v1908 = vsel %vm1900, %v1891, %v1752
    %v1909 = vsel %vm1900, %v1892, %v1754
    %v1910 = vsel %vm1900, %v1893, %v1756
    %v1911 = vsel %vm1900, %v1894, %v1758
    %v1912 = vsel %vm1900, %v1895, %v1760
    %v1913 = vsel %vm1900, %v1896, %v1762
    %v1914 = vsel %vm1900, %v1897, %v1764
    %v1915 = vsel %vm1900, %v1898, %v1766
    %v1916 = vsel %vm1900, %v1899, %v1768
    %v1917 = vld [vmem:[#allocation8] sm:$0xff]
    %v1918 = vld [vmem:[#allocation8 + $0x8] sm:$0xff]
    %v1919 = vld [vmem:[#allocation8 + $0x10] sm:$0xff]
    %v1920 = vld [vmem:[#allocation8 + $0x18] sm:$0xff]
    %v1921 = vld [vmem:[#allocation8 + $0x20] sm:$0xff]
    %v1922 = vld [vmem:[#allocation8 + $0x28] sm:$0xff]
    %v1923 = vld [vmem:[#allocation8 + $0x30] sm:$0xff]
    %v1924 = vld [vmem:[#allocation8 + $0x38] sm:$0xff]
    %v1925 = vld [vmem:[#allocation8 + $0x40] sm:$0xff]
    %v1926 = vld [vmem:[#allocation10] sm:$0x1]
    %v1928 = vlaneseq
    %v1929 = vshrl.u32 %v1928, 7
    %v1930 = vsub.s32 0, %v1929
    %v1931 = vrot.slane %v1926, %v1930
    %vm1933 = vcmask 588800
    %v1935 = vsel %vm1933, %v1901, 0
    %v1938 = vsel %vm1933, %v1902, 0
    %v1941 = vsel %vm1933, %v1903, 0
    %v1944 = vsel %vm1933, %v1904, 0
    %v1947 = vsel %vm1933, %v1905, 0
    %v1950 = vsel %vm1933, %v1906, 0
    %v1953 = vsel %vm1933, %v1907, 0
    %v1956 = vsel %vm1933, %v1908, 0
    %v1959 = vsel %vm1933, %v1909, 0
    %v1962 = vsel %vm1933, %v1910, 0
    %v1965 = vsel %vm1933, %v1911, 0
    %v1968 = vsel %vm1933, %v1912, 0
    %v1971 = vsel %vm1933, %v1913, 0
    %v1974 = vsel %vm1933, %v1914, 0
    %v1977 = vsel %vm1933, %v1915, 0
    %v1980 = vsel %vm1933, %v1916, 0
    %1982 = vmatprep.subr.mxu0 0.0
    %1983 = vmatpush1.msra.mxu0 %v1917
    %1984 = vmatprep.subr.mxu0 0.0
    %1985 = vmatpush1.msra.mxu0 %v1918
    %1986 = vmatprep.subr.mxu0 0.0
    %1987 = vmatpush1.msra.mxu0 %v1919
    %1988 = vmatprep.subr.mxu0 0.0
    %1989 = vmatpush1.msra.mxu0 %v1920
    %1990 = vmatprep.subr.mxu0 0.0
    %1991 = vmatpush1.msra.mxu0 %v1921
    %1992 = vmatprep.subr.mxu0 0.0
    %1993 = vmatpush1.msra.mxu0 %v1922
    %1994 = vmatprep.subr.mxu0 0.0
    %1995 = vmatpush1.msra.mxu0 %v1923
    %1996 = vmatprep.subr.mxu0 0.0
    %1997 = vmatpush1.msra.mxu0 %v1924
    %1998 = vmatprep.subr.mxu0 0.0
    %1999 = vmatpush1.msra.mxu0 %v1925
    %2000 = vmatprep.subr.mxu0 0.0
    %2001 = vmatpush1.msra.mxu0 0.0
    %2002 = vmatprep.subr.mxu0 0.0
    %2003 = vmatpush1.msra.mxu0 0.0
    %2004 = vmatprep.subr.mxu0 0.0
    %2005 = vmatpush1.msra.mxu0 0.0
    %2006 = vmatprep.subr.mxu0 0.0
    %2007 = vmatpush1.msra.mxu0 0.0
    %2008 = vmatprep.subr.mxu0 0.0
    %2009 = vmatpush1.msra.mxu0 0.0
    %2010 = vmatprep.subr.mxu0 0.0
    %2011 = vmatpush1.msra.mxu0 0.0
    %2012 = vmatprep.subr.mxu0 0.0
    %2013 = vmatpush1.msra.mxu0 0.0
    %2014 = vmatprep.subr.mxu0 0.0
    %2015 = vmatpush1.msra.mxu0 0.0
    %2016 = vmatprep.subr.mxu0 0.0
    %2017 = vmatpush1.msra.mxu0 0.0
    %2018 = vmatprep.subr.mxu0 0.0
    %2019 = vmatpush1.msra.mxu0 0.0
    %2020 = vmatprep.subr.mxu0 0.0
    %2021 = vmatpush1.msra.mxu0 0.0
    %2022 = vmatprep.subr.mxu0 0.0
    %2023 = vmatpush1.msra.mxu0 0.0
    %2024 = vmatprep.subr.mxu0 0.0
    %2025 = vmatpush1.msra.mxu0 0.0
    %2026 = vmatprep.subr.mxu0 0.0
    %2027 = vmatpush1.msra.mxu0 0.0
    %2028 = vmatprep.subr.mxu0 0.0
    %2029 = vmatpush1.msra.mxu0 0.0
    %2030 = vmatprep.subr.mxu0 0.0
    %2031 = vmatpush1.msra.mxu0 0.0
    %2032 = vmatprep.subr.mxu0 0.0
    %2033 = vmatpush1.msra.mxu0 0.0
    %2034 = vmatprep.subr.mxu0 0.0
    %2035 = vmatpush1.msra.mxu0 0.0
    %2036 = vmatprep.subr.mxu0 0.0
    %2037 = vmatpush1.msra.mxu0 0.0
    %2038 = vmatprep.subr.mxu0 0.0
    %2039 = vmatpush1.msra.mxu0 0.0
    %2040 = vmatprep.subr.mxu0 0.0
    %2041 = vmatpush1.msra.mxu0 0.0
    %2042 = vmatprep.subr.mxu0 0.0
    %2043 = vmatpush1.msra.mxu0 0.0
    %2044 = vmatprep.subr.mxu0 0.0
    %2045 = vmatpush1.msra.mxu0 0.0
    %2046 = vmatprep.mubr.f32.mxu0 0.0
    %2047 = vmatmul.mubr.f32.gmra.mrb[0].mxu0 %v1935
    %v2048 = vpop.f32.mrb[0].mxu0
    %v2049 = vadd.f32 %v1931, %v2048
    %v2050 = vpop.f32.mrb[0].mxu0
    %2051 = vmatprep.mubr.f32.mxu0 0.0
    %2052 = vmatmul.mubr.f32.gmra.mrb[0].mxu0 %v1938
    %v2053 = vpop.f32.mrb[0].mxu0
    %v2054 = vadd.f32 %v1931, %v2053
    %v2055 = vpop.f32.mrb[0].mxu0
    %2056 = vmatprep.mubr.f32.mxu0 0.0
    %2057 = vmatmul.mubr.f32.gmra.mrb[0].mxu0 %v1941
    %v2058 = vpop.f32.mrb[0].mxu0
    %v2059 = vadd.f32 %v1931, %v2058
    %v2060 = vpop.f32.mrb[0].mxu0
    %2061 = vmatprep.mubr.f32.mxu0 0.0
    %2062 = vmatmul.mubr.f32.gmra.mrb[0].mxu0 %v1944
    %v2063 = vpop.f32.mrb[0].mxu0
    %v2064 = vadd.f32 %v1931, %v2063
    %v2065 = vpop.f32.mrb[0].mxu0
    %2066 = vmatprep.mubr.f32.mxu0 0.0
    %2067 = vmatmul.mubr.f32.gmra.mrb[0].mxu0 %v1947
    %v2068 = vpop.f32.mrb[0].mxu0
    %v2069 = vadd.f32 %v1931, %v2068
    %v2070 = vpop.f32.mrb[0].mxu0
    %2071 = vmatprep.mubr.f32.mxu0 0.0
    %2072 = vmatmul.mubr.f32.gmra.mrb[0].mxu0 %v1950
    %v2073 = vpop.f32.mrb[0].mxu0
    %v2074 = vadd.f32 %v1931, %v2073
    %v2075 = vpop.f32.mrb[0].mxu0
    %2076 = vmatprep.mubr.f32.mxu0 0.0
    %2077 = vmatmul.mubr.f32.gmra.mrb[0].mxu0 %v1953
    %v2078 = vpop.f32.mrb[0].mxu0
    %v2079 = vadd.f32 %v1931, %v2078
    %v2080 = vpop.f32.mrb[0].mxu0
    %2081 = vmatprep.mubr.f32.mxu0 0.0
    %2082 = vmatmul.mubr.f32.gmra.mrb[0].mxu0 %v1956
    %v2083 = vpop.f32.mrb[0].mxu0
    %v2084 = vadd.f32 %v1931, %v2083
    %v2085 = vpop.f32.mrb[0].mxu0
    %2086 = vmatprep.mubr.f32.mxu0 0.0
    %2087 = vmatmul.mubr.f32.gmra.mrb[0].mxu0 %v1959
    %v2088 = vpop.f32.mrb[0].mxu0
    %v2089 = vadd.f32 %v1931, %v2088
    %v2090 = vpop.f32.mrb[0].mxu0
    %2091 = vmatprep.mubr.f32.mxu0 0.0
    %2092 = vmatmul.mubr.f32.gmra.mrb[0].mxu0 %v1962
    %v2093 = vpop.f32.mrb[0].mxu0
    %v2094 = vadd.f32 %v1931, %v2093
    %v2095 = vpop.f32.mrb[0].mxu0
    %2096 = vmatprep.mubr.f32.mxu0 0.0
    %2097 = vmatmul.mubr.f32.gmra.mrb[0].mxu0 %v1965
    %v2098 = vpop.f32.mrb[0].mxu0
    %v2099 = vadd.f32 %v1931, %v2098
    %v2100 = vpop.f32.mrb[0].mxu0
    %2101 = vmatprep.mubr.f32.mxu0 0.0
    %2102 = vmatmul.mubr.f32.gmra.mrb[0].mxu0 %v1968
    %v2103 = vpop.f32.mrb[0].mxu0
    %v2104 = vadd.f32 %v1931, %v2103
    %v2105 = vpop.f32.mrb[0].mxu0
    %2106 = vmatprep.mubr.f32.mxu0 0.0
    %2107 = vmatmul.mubr.f32.gmra.mrb[0].mxu0 %v1971
    %v2108 = vpop.f32.mrb[0].mxu0
    %v2109 = vadd.f32 %v1931, %v2108
    %v2110 = vpop.f32.mrb[0].mxu0
    %2111 = vmatprep.mubr.f32.mxu0 0.0
    %2112 = vmatmul.mubr.f32.gmra.mrb[0].mxu0 %v1974
    %v2113 = vpop.f32.mrb[0].mxu0
    %v2114 = vadd.f32 %v1931, %v2113
    %v2115 = vpop.f32.mrb[0].mxu0
    %2116 = vmatprep.mubr.f32.mxu0 0.0
    %2117 = vmatmul.mubr.f32.gmra.mrb[0].mxu0 %v1977
    %v2118 = vpop.f32.mrb[0].mxu0
    %v2119 = vadd.f32 %v1931, %v2118
    %v2120 = vpop.f32.mrb[0].mxu0
    %2121 = vmatprep.mubr.f32.mxu0 0.0
    %2122 = vmatmul.mubr.f32.gmra.mrb[0].mxu0 %v1980
    %v2123 = vpop.f32.mrb[0].mxu0
    %v2124 = vadd.f32 %v1931, %v2123
    %v2125 = vpop.f32.mrb[0].mxu0
    %2126 = vdwg.mxu0
    %v2127 = vmax.f32 %v2049, 0.0
    %v2128 = vmax.f32 %v2054, 0.0
    %v2129 = vmax.f32 %v2059, 0.0
    %v2130 = vmax.f32 %v2064, 0.0
    %v2131 = vmax.f32 %v2069, 0.0
    %v2132 = vmax.f32 %v2074, 0.0
    %v2133 = vmax.f32 %v2079, 0.0
    %v2134 = vmax.f32 %v2084, 0.0
    %v2135 = vmax.f32 %v2089, 0.0
    %v2136 = vmax.f32 %v2094, 0.0
    %v2137 = vmax.f32 %v2099, 0.0
    %v2138 = vmax.f32 %v2104, 0.0
    %v2139 = vmax.f32 %v2109, 0.0
    %v2140 = vmax.f32 %v2114, 0.0
    %v2141 = vmax.f32 %v2119, 0.0
    %v2142 = vmax.f32 %v2124, 0.0
    %2143 = vxpose.xlu0.b32.start [1/16] %v2127, 128
    %2144 = vxpose.xlu0.b32.cont [2/16] %v2128, 128
    %2145 = vxpose.xlu0.b32.cont [3/16] %v2129, 128
    %2146 = vxpose.xlu0.b32.cont [4/16] %v2130, 128
    %2147 = vxpose.xlu0.b32.cont [5/16] %v2131, 128
    %2148 = vxpose.xlu0.b32.cont [6/16] %v2132, 128
    %2149 = vxpose.xlu0.b32.cont [7/16] %v2133, 128
    %2150 = vxpose.xlu0.b32.cont [8/16] %v2134, 128
    %2151 = vxpose.xlu0.b32.cont [9/16] 0.0, 128
    %2152 = vxpose.xlu0.b32.cont [10/16] 0.0, 128
    %2153 = vxpose.xlu0.b32.cont [11/16] 0.0, 128
    %2154 = vxpose.xlu0.b32.cont [12/16] 0.0, 128
    %2155 = vxpose.xlu0.b32.cont [13/16] 0.0, 128
    %2156 = vxpose.xlu0.b32.cont [14/16] 0.0, 128
    %2157 = vxpose.xlu0.b32.cont [15/16] 0.0, 128
    %2158 = vxpose.xlu0.b32.end [16/16] 0.0, 128
    %v2159 = vpop.trf.xlu0
    %v2160 = vpop.trf.xlu0
    %v2161 = vpop.trf.xlu0
    %v2162 = vpop.trf.xlu0
    %v2163 = vpop.trf.xlu0
    %v2164 = vpop.trf.xlu0
    %v2165 = vpop.trf.xlu0
    %v2166 = vpop.trf.xlu0
    %v2167 = vpop.trf.xlu0
    %v2168 = vpop.trf.xlu0
    %v2169 = vpop.trf.xlu0
    %v2170 = vpop.trf.xlu0
    %v2171 = vpop.trf.xlu0
    %v2172 = vpop.trf.xlu0
    %v2173 = vpop.trf.xlu0
    %v2174 = vpop.trf.xlu0
    %2175 = vst.msk [vmem:[#allocation11] sm:$0xff] %vm1900, %v2159
    %2176 = vxpose.xlu0.b32.start [1/16] %v2135, 128
    %2177 = vxpose.xlu0.b32.cont [2/16] %v2136, 128
    %2178 = vxpose.xlu0.b32.cont [3/16] %v2137, 128
    %2179 = vxpose.xlu0.b32.cont [4/16] %v2138, 128
    %2180 = vxpose.xlu0.b32.cont [5/16] %v2139, 128
    %2181 = vxpose.xlu0.b32.cont [6/16] %v2140, 128
    %2182 = vxpose.xlu0.b32.cont [7/16] %v2141, 128
    %2183 = vxpose.xlu0.b32.cont [8/16] %v2142, 128
    %2184 = vxpose.xlu0.b32.cont [9/16] 0.0, 128
    %2185 = vxpose.xlu0.b32.cont [10/16] 0.0, 128
    %2186 = vxpose.xlu0.b32.cont [11/16] 0.0, 128
    %2187 = vxpose.xlu0.b32.cont [12/16] 0.0, 128
    %2188 = vxpose.xlu0.b32.cont [13/16] 0.0, 128
    %2189 = vxpose.xlu0.b32.cont [14/16] 0.0, 128
    %2190 = vxpose.xlu0.b32.cont [15/16] 0.0, 128
    %2191 = vxpose.xlu0.b32.end [16/16] 0.0, 128
    %v2192 = vpop.trf.xlu0
    %v2193 = vpop.trf.xlu0
    %v2194 = vpop.trf.xlu0
    %v2195 = vpop.trf.xlu0
    %v2196 = vpop.trf.xlu0
    %v2197 = vpop.trf.xlu0
    %v2198 = vpop.trf.xlu0
    %v2199 = vpop.trf.xlu0
    %v2200 = vpop.trf.xlu0
    %v2201 = vpop.trf.xlu0
    %v2202 = vpop.trf.xlu0
    %v2203 = vpop.trf.xlu0
    %v2204 = vpop.trf.xlu0
    %v2205 = vpop.trf.xlu0
    %v2206 = vpop.trf.xlu0
    %v2207 = vpop.trf.xlu0
    %s2208 = scalar_lea.vmem [#allocation11], 8
    %2209 = vst.msk [vmem:[%s2208] sm:$0xff] %vm1900, %v2192
    // Predicated region
    $region42: #{tpu_custom_call.1} parent=1 // pred_check
      _
    $region43: #{tpu_custom_call.1} parent=1 // pred_check_branch
      %2211 = sbr.rel (0) target = $region45
    $region44: #{tpu_custom_call.1} parent=1 // pred_region
      %s2213 = ssub.s32 256, 256
      %2214 = vsyncadd [#allocation4], %s2213
      %s2215 = sshll.u32 [#allocation11], 4
      %s2216 = int_to_ptr.vmem [resolvable:$true] %s2215
      %2221 = dma.vmem_to_hbm [thread:$0]  %s2216, 256, %s5, [#allocation4], 128, 128, 8
    $region45: #{tpu_custom_call.1} parent=1 // pred_fallthru
      _
    // Predicated region
    $region46: #{tpu_custom_call.1} parent=1 // pred_check
      _
    $region47: #{tpu_custom_call.1} parent=1 // pred_check_branch
      %2223 = sbr.rel (0) target = $region49
    $region48: #{tpu_custom_call.1} parent=1 // pred_region
      %2224 = dma.done [#allocation4], 256
    $region49: #{tpu_custom_call.1} parent=1 // pred_fallthru
      _
    %2225 = vsyncpa [#allocation3], 1
    %2226 = vsyncpa [#allocation6], 1
    %2227 = vsyncpa [#allocation9], 1
    %2228 = vsyncpa [#allocation4], 1

</llo_original>
